<compile_context>
chip_gen: v7x
topology: tpu7x:2x2x1
jax: 0.10.0
libtpu: 0.0.40
codegen_flags: <defaults>
</compile_context>

<pallas_src>
import functools

import jax
import jax.numpy as jnp
from jax.experimental import pallas as pl
from jax.experimental.pallas import tpu as pltpu


def _interp_matrix(n_out, n_in):
    """1-D linear interpolation matrix (n_out, n_in), align_corners=True."""
    if n_out == 1:
        src = jnp.zeros((1,), jnp.float32)
    else:
        src = jnp.arange(n_out, dtype=jnp.float32) * (n_in - 1) / (n_out - 1)
    lo = jnp.clip(jnp.floor(src), 0, n_in - 1).astype(jnp.int32)
    hi = jnp.minimum(lo + 1, n_in - 1)
    frac = src - lo.astype(jnp.float32)
    R = jnp.zeros((n_out, n_in), jnp.float32)
    R = R.at[jnp.arange(n_out), lo].add(1.0 - frac)
    R = R.at[jnp.arange(n_out), hi].add(frac)
    return R


def _reassemble_kernel(x_ref, w_ref, b_ref, ry_ref, rx_ref, o_ref, z_s, t_s,
                       *, Hp, Wp, Wo, TDp):
    """Per-(batch, channel-tile) body.

    x_ref:  (1, Np+1, D)       token block incl. cls (cls dropped via +1 offset)
    w_ref:  (D, TDp)           1x1 conv weight slice (in, out-tile)
    b_ref:  (1, TDp)           bias slice (f32)
    ry_ref: (Ho, Hp)           H-axis interpolation matrix (f32)
    rx_ref: (Wo, Wp)           W-axis interpolation matrix (f32)
    o_ref:  (1, 1, Ho, Wo*TDp) lane-dense NHWC-flat output block
    z_s:    VMEM (Np+1, TDp)   conv output scratch (f32; row 0 = unused cls)
    t_s:    VMEM (Hp, Wo, TDp) after W-interp
    """
    # 1) 1x1 conv as one MXU matmul over all tokens of this batch / Dp-tile.
    #    bf16 x bf16 -> f32 accumulation by default.  The cls row rides along
    #    (1 extra row of work) and is simply never read back.
    z_s[...] = (jnp.dot(x_ref[0], w_ref[...],
                        preferred_element_type=jnp.float32) + b_ref[...])

    # 2) Separable bilinear, W axis: per input row h,
    #    (Wo, Wp) @ (Wp, TDp) -> (Wo, TDp).  The +1 row offset drops the cls
    #    token (pure in-VMEM offset read; no wrapper HBM round trip).
    #    Static loop: Hp is small, offsets stay compile-time constants.
    for h in range(Hp):
        t_s[h] = jnp.dot(rx_ref[...], z_s[1 + h * Wp: 1 + (h + 1) * Wp, :],
                         preferred_element_type=jnp.float32)

    # 3) Separable bilinear, H axis: one small MXU matmul per output column o,
    #    (Ho, Hp) @ (Hp, TDp), stored straight into the lane-dense output block
    #    (replaces the old regroup copy loop; stores are lane-aligned whenever
    #    TDp is a multiple of 128).
    for o in range(Wo):
        slab = jnp.dot(ry_ref[...], t_s[:, o, :],
                       preferred_element_type=jnp.float32)
        o_ref[0, 0, :, o * TDp:(o + 1) * TDp] = slab.astype(o_ref.dtype)


def reassemble(x, w, b, img_size, patch_size, scale_size, *,
               compute_dtype=jnp.bfloat16, out_dtype=None, channels_last=False):
    """x: (B, Np+1, D) tokens.  Returns NCHW (B, D', Ho, Wo) like PyTorch,
    or NHWC (B, Ho, Wo, D') when channels_last=True.

    compute_dtype: dtype of the 1x1-conv matmul operands (tokens, weight).
      Default bfloat16 (native MXU rate, halved token DMA); accumulation is
      always f32.  Pass jnp.float32 for the full-precision path.
    out_dtype: dtype of the kernel output / HBM write (default: x.dtype).
    """
    H, W, _ = img_size
    Hp, Wp = H // patch_size, W // patch_size
    # Exact integer output-size computation (no float truncation off-by-one).
    Ho = (Hp * patch_size) // scale_size
    Wo = (Wp * patch_size) // scale_size
    B, Np1, D = x.shape
    Np = Hp * Wp
    assert Np1 == Np + 1, (Np1, Np)
    Dp = w.shape[1]
    if out_dtype is None:
        out_dtype = x.dtype

    # Channel tile: prefer 256 (fills the 256-wide MXU on v6e/v7x), else 128,
    # else no split.  The Dp-tile grid axis gives megacore work at B=1 and
    # shrinks per-step VMEM buffers (critical under v7x's 64 MiB).
    if Dp > 256 and Dp % 256 == 0:
        TDp = 256
    elif Dp > 128 and Dp % 128 == 0:
        TDp = 128
    else:
        TDp = Dp
    NDp = Dp // TDp

    Ry = _interp_matrix(Ho, Hp)                      # (Ho, Hp)
    Rx = _interp_matrix(Wo, Wp)                      # (Wo, Wp)
    b2 = b.reshape(1, Dp).astype(jnp.float32)

    # bf16 conv operands by default; in a real pipeline the tokens normally
    # arrive already in bf16, making this a no-op.
    x_in = x if x.dtype == compute_dtype else x.astype(compute_dtype)
    w_in = w if w.dtype == compute_dtype else w.astype(compute_dtype)

    kernel = functools.partial(_reassemble_kernel, Hp=Hp, Wp=Wp, Wo=Wo, TDp=TDp)

    # Itemized VMEM footprint (double-buffered blocks + scratch) + 25% headroom,
    # capped at 48 MiB to stay well under v7x's 64 MiB physical VMEM.
    itok = jnp.dtype(x_in.dtype).itemsize
    iw = jnp.dtype(w_in.dtype).itemsize
    iout = jnp.dtype(out_dtype).itemsize
    fp = (2 * (Np + 1) * D * itok               # token block (double-buffered)
          + 2 * D * TDp * iw                    # weight slice
          + 2 * TDp * 4                         # bias slice
          + 2 * (Ho * Hp + Wo * Wp) * 4         # Ry, Rx
          + 2 * Ho * Wo * TDp * iout            # output block
          + (Np + 1) * TDp * 4                  # z_s scratch
          + Hp * Wo * TDp * 4)                  # t_s scratch
    vmem_limit = int(max(4 * 2**20, min(48 * 2**20, fp + fp // 4)))

    out = pl.pallas_call(
        kernel,
        out_shape=jax.ShapeDtypeStruct((B, NDp, Ho, Wo * TDp), out_dtype),
        grid_spec=pltpu.PrefetchScalarGridSpec(
            num_scalar_prefetch=0,
            grid=(B, NDp),
            in_specs=[
                # Full token block (cls included).  The index_map ignores the
                # Dp axis, so the DMA is not re-issued when only `di` changes.
                pl.BlockSpec((1, Np + 1, D), lambda bi, di: (bi, 0, 0)),
                pl.BlockSpec((D, TDp), lambda bi, di: (0, di)),
                pl.BlockSpec((1, TDp), lambda bi, di: (0, di)),
                pl.BlockSpec((Ho, Hp), lambda bi, di: (0, 0)),
                pl.BlockSpec((Wo, Wp), lambda bi, di: (0, 0)),
            ],
            out_specs=pl.BlockSpec((1, 1, Ho, Wo * TDp),
                                   lambda bi, di: (bi, di, 0, 0)),
            scratch_shapes=[
                pltpu.VMEM((Np + 1, TDp), jnp.float32),    # conv output
                pltpu.VMEM((Hp, Wo, TDp), jnp.float32),    # after W-interp
            ],
        ),
        compiler_params=pltpu.CompilerParams(
            dimension_semantics=("parallel", "parallel"),
            vmem_limit_bytes=vmem_limit,
        ),
    )(x_in, w_in, b2, Ry, Rx)

    out = out.reshape(B, NDp, Ho, Wo, TDp)
    if channels_last:
        # NHWC; metadata-only (no data movement) whenever NDp == 1 (Dp <= 256).
        return jnp.transpose(out, (0, 2, 3, 1, 4)).reshape(B, Ho, Wo, Dp)
    # NCHW to match PyTorch (single XLA transpose).
    return jnp.transpose(out, (0, 1, 4, 2, 3)).reshape(B, Dp, Ho, Wo)


def reference(x, w, b, img_size, patch_size, scale_size):
    """Pure-JAX reference (gather-based bilinear, independent of the kernel)."""
    H, W, _ = img_size
    Hp, Wp = H // patch_size, W // patch_size
    Ho = (Hp * patch_size) // scale_size
    Wo = (Wp * patch_size) // scale_size
    B, _, D = x.shape
    z = x[:, 1:, :].reshape(B, Hp, Wp, D) @ w + b            # (B,Hp,Wp,Dp)
    ys = jnp.arange(Ho, dtype=jnp.float32) * (Hp - 1) / max(Ho - 1, 1)
    xs = jnp.arange(Wo, dtype=jnp.float32) * (Wp - 1) / max(Wo - 1, 1)
    y0 = jnp.floor(ys).astype(jnp.int32)
    y1 = jnp.minimum(y0 + 1, Hp - 1)
    x0 = jnp.floor(xs).astype(jnp.int32)
    x1 = jnp.minimum(x0 + 1, Wp - 1)
    fy = (ys - y0)[None, :, None, None]
    fx = (xs - x0)[None, None, :, None]
    top = z[:, y0][:, :, x0] * (1 - fx) + z[:, y0][:, :, x1] * fx
    bot = z[:, y1][:, :, x0] * (1 - fx) + z[:, y1][:, :, x1] * fx
    out = top * (1 - fy) + bot * fy
    return jnp.transpose(out, (0, 3, 1, 2))


if __name__ == "__main__":
    # Small config consistent with the module:
    #   img_size=(16,16,3), patch_size=4, scale_size=2
    #   => Hp=Wp=4, Np=16, scale=2.0 => Ho=Wo=8
    img_size = (16, 16, 3)
    patch_size, scale_size = 4, 2
    embed_size, new_embed_size = 32, 16
    B = 2
    Np1 = (img_size[0] // patch_size) * (img_size[1] // patch_size) + 1  # 17

    key = jax.random.PRNGKey(0)
    kx, kw, kb = jax.random.split(key, 3)
    x = jax.random.normal(kx, (B, Np1, embed_size), dtype=jnp.float32)
    # Conv2d(embed, new_embed, k=1) weight (new_embed, embed, 1, 1) -> (embed, new_embed)
    w = 0.1 * jax.random.normal(kw, (embed_size, new_embed_size), dtype=jnp.float32)
    b = 0.1 * jax.random.normal(kb, (new_embed_size,), dtype=jnp.float32)

    y_ref = reference(x, w, b, img_size, patch_size, scale_size)

    # Full-precision path: must match the reference tightly.
    y32 = reassemble(x, w, b, img_size, patch_size, scale_size,
                     compute_dtype=jnp.float32)
    y32 = jax.block_until_ready(y32)
    assert y32.shape == (B, new_embed_size, 8, 8), y32.shape
    assert jnp.allclose(y32, y_ref, atol=1e-4, rtol=1e-4), float(
        jnp.max(jnp.abs(y32 - y_ref)))

    # Default bf16 conv path (f32 accumulation): looser tolerance.
    y = reassemble(x, w, b, img_size, patch_size, scale_size)
    y = jax.block_until_ready(y)
    assert y.shape == (B, new_embed_size, 8, 8), y.shape
    assert jnp.allclose(y, y_ref, atol=3e-2, rtol=3e-2), float(
        jnp.max(jnp.abs(y - y_ref)))

    print("KERNEL_OK")
</pallas_src>

<mosaic_0001>
module attributes {stable_mosaic.version = 11 : i64} {
  func.func @_reassemble_kernel(%arg0: i32, %arg1: i32, %arg2: memref<1x17x32xf32, #tpu.memory_space<vmem>>, %arg3: memref<32x16xf32, #tpu.memory_space<vmem>>, %arg4: memref<1x16xf32, #tpu.memory_space<vmem>>, %arg5: memref<8x4xf32, #tpu.memory_space<vmem>>, %arg6: memref<8x4xf32, #tpu.memory_space<vmem>>, %arg7: memref<1x1x8x128xf32, #tpu.memory_space<vmem>>, %arg8: memref<17x16xf32, #tpu.memory_space<vmem>>, %arg9: memref<4x8x16xf32, #tpu.memory_space<vmem>>) attributes {dimension_semantics = [#tpu.dimension_semantics<parallel>, #tpu.dimension_semantics<parallel>], iteration_bounds = array<i64: 2, 1>, scalar_prefetch = 0 : i64, scratch_operands = 2 : i64, tpu.core_type = #tpu.core_type<tc>, window_params = [{transform_indices = @transform_0, window_bounds = array<i64: 1, 17, 32>}, {transform_indices = @transform_1, window_bounds = array<i64: 32, 16>}, {transform_indices = @transform_2, window_bounds = array<i64: 1, 16>}, {pipeline_mode = #tpu.pipeline_mode<synchronous>, transform_indices = @transform_3, window_bounds = array<i64: 8, 4>}, {pipeline_mode = #tpu.pipeline_mode<synchronous>, transform_indices = @transform_4, window_bounds = array<i64: 8, 4>}, {transform_indices = @transform_5, window_bounds = array<i64: 1, 1, 8, 128>}]} {
    %c0 = arith.constant 0 : index
    %c0_0 = arith.constant 0 : index
    %c0_1 = arith.constant 0 : index
    %0 = vector.load %arg2[%c0, %c0_0, %c0_1] : memref<1x17x32xf32, #tpu.memory_space<vmem>>, vector<1x17x32xf32>
    %1 = vector.shape_cast %0 : vector<1x17x32xf32> to vector<17x32xf32>
    %c0_2 = arith.constant 0 : index
    %c0_3 = arith.constant 0 : index
    %2 = vector.load %arg3[%c0_2, %c0_3] : memref<32x16xf32, #tpu.memory_space<vmem>>, vector<32x16xf32>
    %cst = arith.constant dense<0.000000e+00> : vector<17x16xf32>
    %3 = tpu.matmul %1, %2, %cst {dimension_numbers = #tpu.dot_dimension_numbers<[1], [0], [0], [1], [0, 0, 1, 1], [], []>} : vector<17x32xf32>, vector<32x16xf32>, vector<17x16xf32> -> vector<17x16xf32>
    %c0_4 = arith.constant 0 : index
    %c0_5 = arith.constant 0 : index
    %4 = vector.load %arg4[%c0_4, %c0_5] : memref<1x16xf32, #tpu.memory_space<vmem>>, vector<1x16xf32>
    %5 = vector.broadcast %4 : vector<1x16xf32> to vector<17x16xf32>
    %6 = arith.addf %3, %5 : vector<17x16xf32>
    %c0_6 = arith.constant 0 : index
    %c0_7 = arith.constant 0 : index
    %7 = vector.load %arg8[%c0_6, %c0_7] : memref<17x16xf32, #tpu.memory_space<vmem>>, vector<17x16xf32>
    tpu.vector_store %arg8[%c0_6, %c0_7], %6 {strides = array<i32>} : memref<17x16xf32, #tpu.memory_space<vmem>>, vector<17x16xf32>,
    %c0_8 = arith.constant 0 : index
    %c0_9 = arith.constant 0 : index
    %8 = vector.load %arg6[%c0_8, %c0_9] : memref<8x4xf32, #tpu.memory_space<vmem>>, vector<8x4xf32>
    %c1 = arith.constant 1 : index
    %c0_10 = arith.constant 0 : index
    %9 = vector.load %arg8[%c1, %c0_10] : memref<17x16xf32, #tpu.memory_space<vmem>>, vector<4x16xf32>
    %cst_11 = arith.constant dense<0.000000e+00> : vector<8x16xf32>
    %10 = tpu.matmul %8, %9, %cst_11 {dimension_numbers = #tpu.dot_dimension_numbers<[1], [0], [0], [1], [0, 0, 1, 1], [], []>} : vector<8x4xf32>, vector<4x16xf32>, vector<8x16xf32> -> vector<8x16xf32>
    %c0_12 = arith.constant 0 : index
    %c0_13 = arith.constant 0 : index
    %c0_14 = arith.constant 0 : index
    %11 = vector.load %arg9[%c0_12, %c0_13, %c0_14] : memref<4x8x16xf32, #tpu.memory_space<vmem>>, vector<1x8x16xf32>
    %12 = vector.shape_cast %11 : vector<1x8x16xf32> to vector<8x16xf32>
    %13 = vector.shape_cast %10 : vector<8x16xf32> to vector<1x8x16xf32>
    tpu.vector_store %arg9[%c0_12, %c0_13, %c0_14], %13 {strides = array<i32>} : memref<4x8x16xf32, #tpu.memory_space<vmem>>, vector<1x8x16xf32>,
    %c0_15 = arith.constant 0 : index
    %c0_16 = arith.constant 0 : index
    %14 = vector.load %arg6[%c0_15, %c0_16] : memref<8x4xf32, #tpu.memory_space<vmem>>, vector<8x4xf32>
    %c5 = arith.constant 5 : index
    %c0_17 = arith.constant 0 : index
    %15 = vector.load %arg8[%c5, %c0_17] : memref<17x16xf32, #tpu.memory_space<vmem>>, vector<4x16xf32>
    %cst_18 = arith.constant dense<0.000000e+00> : vector<8x16xf32>
    %16 = tpu.matmul %14, %15, %cst_18 {dimension_numbers = #tpu.dot_dimension_numbers<[1], [0], [0], [1], [0, 0, 1, 1], [], []>} : vector<8x4xf32>, vector<4x16xf32>, vector<8x16xf32> -> vector<8x16xf32>
    %c1_19 = arith.constant 1 : index
    %c0_20 = arith.constant 0 : index
    %c0_21 = arith.constant 0 : index
    %17 = vector.load %arg9[%c1_19, %c0_20, %c0_21] : memref<4x8x16xf32, #tpu.memory_space<vmem>>, vector<1x8x16xf32>
    %18 = vector.shape_cast %17 : vector<1x8x16xf32> to vector<8x16xf32>
    %19 = vector.shape_cast %16 : vector<8x16xf32> to vector<1x8x16xf32>
    tpu.vector_store %arg9[%c1_19, %c0_20, %c0_21], %19 {strides = array<i32>} : memref<4x8x16xf32, #tpu.memory_space<vmem>>, vector<1x8x16xf32>,
    %c0_22 = arith.constant 0 : index
    %c0_23 = arith.constant 0 : index
    %20 = vector.load %arg6[%c0_22, %c0_23] : memref<8x4xf32, #tpu.memory_space<vmem>>, vector<8x4xf32>
    %c9 = arith.constant 9 : index
    %c0_24 = arith.constant 0 : index
    %21 = vector.load %arg8[%c9, %c0_24] : memref<17x16xf32, #tpu.memory_space<vmem>>, vector<4x16xf32>
    %cst_25 = arith.constant dense<0.000000e+00> : vector<8x16xf32>
    %22 = tpu.matmul %20, %21, %cst_25 {dimension_numbers = #tpu.dot_dimension_numbers<[1], [0], [0], [1], [0, 0, 1, 1], [], []>} : vector<8x4xf32>, vector<4x16xf32>, vector<8x16xf32> -> vector<8x16xf32>
    %c2 = arith.constant 2 : index
    %c0_26 = arith.constant 0 : index
    %c0_27 = arith.constant 0 : index
    %23 = vector.load %arg9[%c2, %c0_26, %c0_27] : memref<4x8x16xf32, #tpu.memory_space<vmem>>, vector<1x8x16xf32>
    %24 = vector.shape_cast %23 : vector<1x8x16xf32> to vector<8x16xf32>
    %25 = vector.shape_cast %22 : vector<8x16xf32> to vector<1x8x16xf32>
    tpu.vector_store %arg9[%c2, %c0_26, %c0_27], %25 {strides = array<i32>} : memref<4x8x16xf32, #tpu.memory_space<vmem>>, vector<1x8x16xf32>,
    %c0_28 = arith.constant 0 : index
    %c0_29 = arith.constant 0 : index
    %26 = vector.load %arg6[%c0_28, %c0_29] : memref<8x4xf32, #tpu.memory_space<vmem>>, vector<8x4xf32>
    %c13 = arith.constant 13 : index
    %c0_30 = arith.constant 0 : index
    %27 = vector.load %arg8[%c13, %c0_30] : memref<17x16xf32, #tpu.memory_space<vmem>>, vector<4x16xf32>
    %cst_31 = arith.constant dense<0.000000e+00> : vector<8x16xf32>
    %28 = tpu.matmul %26, %27, %cst_31 {dimension_numbers = #tpu.dot_dimension_numbers<[1], [0], [0], [1], [0, 0, 1, 1], [], []>} : vector<8x4xf32>, vector<4x16xf32>, vector<8x16xf32> -> vector<8x16xf32>
    %c3 = arith.constant 3 : index
    %c0_32 = arith.constant 0 : index
    %c0_33 = arith.constant 0 : index
    %29 = vector.load %arg9[%c3, %c0_32, %c0_33] : memref<4x8x16xf32, #tpu.memory_space<vmem>>, vector<1x8x16xf32>
    %30 = vector.shape_cast %29 : vector<1x8x16xf32> to vector<8x16xf32>
    %31 = vector.shape_cast %28 : vector<8x16xf32> to vector<1x8x16xf32>
    tpu.vector_store %arg9[%c3, %c0_32, %c0_33], %31 {strides = array<i32>} : memref<4x8x16xf32, #tpu.memory_space<vmem>>, vector<1x8x16xf32>,
    %c0_34 = arith.constant 0 : index
    %c0_35 = arith.constant 0 : index
    %32 = vector.load %arg5[%c0_34, %c0_35] : memref<8x4xf32, #tpu.memory_space<vmem>>, vector<8x4xf32>
    %c0_36 = arith.constant 0 : index
    %c0_37 = arith.constant 0 : index
    %c0_38 = arith.constant 0 : index
    %33 = vector.load %arg9[%c0_36, %c0_37, %c0_38] : memref<4x8x16xf32, #tpu.memory_space<vmem>>, vector<4x1x16xf32>
    %34 = vector.shape_cast %33 : vector<4x1x16xf32> to vector<4x16xf32>
    %cst_39 = arith.constant dense<0.000000e+00> : vector<8x16xf32>
    %35 = tpu.matmul %32, %34, %cst_39 {dimension_numbers = #tpu.dot_dimension_numbers<[1], [0], [0], [1], [0, 0, 1, 1], [], []>} : vector<8x4xf32>, vector<4x16xf32>, vector<8x16xf32> -> vector<8x16xf32>
    %c0_40 = arith.constant 0 : index
    %c0_41 = arith.constant 0 : index
    %c0_42 = arith.constant 0 : index
    %c0_43 = arith.constant 0 : index
    %36 = vector.load %arg7[%c0_40, %c0_41, %c0_42, %c0_43] : memref<1x1x8x128xf32, #tpu.memory_space<vmem>>, vector<1x1x8x16xf32>
    %37 = vector.shape_cast %36 : vector<1x1x8x16xf32> to vector<8x16xf32>
    %38 = vector.shape_cast %35 : vector<8x16xf32> to vector<1x1x8x16xf32>
    tpu.vector_store %arg7[%c0_40, %c0_41, %c0_42, %c0_43], %38 {strides = array<i32>} : memref<1x1x8x128xf32, #tpu.memory_space<vmem>>, vector<1x1x8x16xf32>,
    %c0_44 = arith.constant 0 : index
    %c0_45 = arith.constant 0 : index
    %39 = vector.load %arg5[%c0_44, %c0_45] : memref<8x4xf32, #tpu.memory_space<vmem>>, vector<8x4xf32>
    %c0_46 = arith.constant 0 : index
    %c1_47 = arith.constant 1 : index
    %c0_48 = arith.constant 0 : index
    %40 = vector.load %arg9[%c0_46, %c1_47, %c0_48] : memref<4x8x16xf32, #tpu.memory_space<vmem>>, vector<4x1x16xf32>
    %41 = vector.shape_cast %40 : vector<4x1x16xf32> to vector<4x16xf32>
    %cst_49 = arith.constant dense<0.000000e+00> : vector<8x16xf32>
    %42 = tpu.matmul %39, %41, %cst_49 {dimension_numbers = #tpu.dot_dimension_numbers<[1], [0], [0], [1], [0, 0, 1, 1], [], []>} : vector<8x4xf32>, vector<4x16xf32>, vector<8x16xf32> -> vector<8x16xf32>
    %c0_50 = arith.constant 0 : index
    %c0_51 = arith.constant 0 : index
    %c0_52 = arith.constant 0 : index
    %c16 = arith.constant 16 : index
    %43 = vector.load %arg7[%c0_50, %c0_51, %c0_52, %c16] : memref<1x1x8x128xf32, #tpu.memory_space<vmem>>, vector<1x1x8x16xf32>
    %44 = vector.shape_cast %43 : vector<1x1x8x16xf32> to vector<8x16xf32>
    %45 = vector.shape_cast %42 : vector<8x16xf32> to vector<1x1x8x16xf32>
    tpu.vector_store %arg7[%c0_50, %c0_51, %c0_52, %c16], %45 {strides = array<i32>} : memref<1x1x8x128xf32, #tpu.memory_space<vmem>>, vector<1x1x8x16xf32>,
    %c0_53 = arith.constant 0 : index
    %c0_54 = arith.constant 0 : index
    %46 = vector.load %arg5[%c0_53, %c0_54] : memref<8x4xf32, #tpu.memory_space<vmem>>, vector<8x4xf32>
    %c0_55 = arith.constant 0 : index
    %c2_56 = arith.constant 2 : index
    %c0_57 = arith.constant 0 : index
    %47 = vector.load %arg9[%c0_55, %c2_56, %c0_57] : memref<4x8x16xf32, #tpu.memory_space<vmem>>, vector<4x1x16xf32>
    %48 = vector.shape_cast %47 : vector<4x1x16xf32> to vector<4x16xf32>
    %cst_58 = arith.constant dense<0.000000e+00> : vector<8x16xf32>
    %49 = tpu.matmul %46, %48, %cst_58 {dimension_numbers = #tpu.dot_dimension_numbers<[1], [0], [0], [1], [0, 0, 1, 1], [], []>} : vector<8x4xf32>, vector<4x16xf32>, vector<8x16xf32> -> vector<8x16xf32>
    %c0_59 = arith.constant 0 : index
    %c0_60 = arith.constant 0 : index
    %c0_61 = arith.constant 0 : index
    %c32 = arith.constant 32 : index
    %50 = vector.load %arg7[%c0_59, %c0_60, %c0_61, %c32] : memref<1x1x8x128xf32, #tpu.memory_space<vmem>>, vector<1x1x8x16xf32>
    %51 = vector.shape_cast %50 : vector<1x1x8x16xf32> to vector<8x16xf32>
    %52 = vector.shape_cast %49 : vector<8x16xf32> to vector<1x1x8x16xf32>
    tpu.vector_store %arg7[%c0_59, %c0_60, %c0_61, %c32], %52 {strides = array<i32>} : memref<1x1x8x128xf32, #tpu.memory_space<vmem>>, vector<1x1x8x16xf32>,
    %c0_62 = arith.constant 0 : index
    %c0_63 = arith.constant 0 : index
    %53 = vector.load %arg5[%c0_62, %c0_63] : memref<8x4xf32, #tpu.memory_space<vmem>>, vector<8x4xf32>
    %c0_64 = arith.constant 0 : index
    %c3_65 = arith.constant 3 : index
    %c0_66 = arith.constant 0 : index
    %54 = vector.load %arg9[%c0_64, %c3_65, %c0_66] : memref<4x8x16xf32, #tpu.memory_space<vmem>>, vector<4x1x16xf32>
    %55 = vector.shape_cast %54 : vector<4x1x16xf32> to vector<4x16xf32>
    %cst_67 = arith.constant dense<0.000000e+00> : vector<8x16xf32>
    %56 = tpu.matmul %53, %55, %cst_67 {dimension_numbers = #tpu.dot_dimension_numbers<[1], [0], [0], [1], [0, 0, 1, 1], [], []>} : vector<8x4xf32>, vector<4x16xf32>, vector<8x16xf32> -> vector<8x16xf32>
    %c0_68 = arith.constant 0 : index
    %c0_69 = arith.constant 0 : index
    %c0_70 = arith.constant 0 : index
    %c48 = arith.constant 48 : index
    %57 = vector.load %arg7[%c0_68, %c0_69, %c0_70, %c48] : memref<1x1x8x128xf32, #tpu.memory_space<vmem>>, vector<1x1x8x16xf32>
    %58 = vector.shape_cast %57 : vector<1x1x8x16xf32> to vector<8x16xf32>
    %59 = vector.shape_cast %56 : vector<8x16xf32> to vector<1x1x8x16xf32>
    tpu.vector_store %arg7[%c0_68, %c0_69, %c0_70, %c48], %59 {strides = array<i32>} : memref<1x1x8x128xf32, #tpu.memory_space<vmem>>, vector<1x1x8x16xf32>,
    %c0_71 = arith.constant 0 : index
    %c0_72 = arith.constant 0 : index
    %60 = vector.load %arg5[%c0_71, %c0_72] : memref<8x4xf32, #tpu.memory_space<vmem>>, vector<8x4xf32>
    %c0_73 = arith.constant 0 : index
    %c4 = arith.constant 4 : index
    %c0_74 = arith.constant 0 : index
    %61 = vector.load %arg9[%c0_73, %c4, %c0_74] : memref<4x8x16xf32, #tpu.memory_space<vmem>>, vector<4x1x16xf32>
    %62 = vector.shape_cast %61 : vector<4x1x16xf32> to vector<4x16xf32>
    %cst_75 = arith.constant dense<0.000000e+00> : vector<8x16xf32>
    %63 = tpu.matmul %60, %62, %cst_75 {dimension_numbers = #tpu.dot_dimension_numbers<[1], [0], [0], [1], [0, 0, 1, 1], [], []>} : vector<8x4xf32>, vector<4x16xf32>, vector<8x16xf32> -> vector<8x16xf32>
    %c0_76 = arith.constant 0 : index
    %c0_77 = arith.constant 0 : index
    %c0_78 = arith.constant 0 : index
    %c64 = arith.constant 64 : index
    %64 = vector.load %arg7[%c0_76, %c0_77, %c0_78, %c64] : memref<1x1x8x128xf32, #tpu.memory_space<vmem>>, vector<1x1x8x16xf32>
    %65 = vector.shape_cast %64 : vector<1x1x8x16xf32> to vector<8x16xf32>
    %66 = vector.shape_cast %63 : vector<8x16xf32> to vector<1x1x8x16xf32>
    tpu.vector_store %arg7[%c0_76, %c0_77, %c0_78, %c64], %66 {strides = array<i32>} : memref<1x1x8x128xf32, #tpu.memory_space<vmem>>, vector<1x1x8x16xf32>,
    %c0_79 = arith.constant 0 : index
    %c0_80 = arith.constant 0 : index
    %67 = vector.load %arg5[%c0_79, %c0_80] : memref<8x4xf32, #tpu.memory_space<vmem>>, vector<8x4xf32>
    %c0_81 = arith.constant 0 : index
    %c5_82 = arith.constant 5 : index
    %c0_83 = arith.constant 0 : index
    %68 = vector.load %arg9[%c0_81, %c5_82, %c0_83] : memref<4x8x16xf32, #tpu.memory_space<vmem>>, vector<4x1x16xf32>
    %69 = vector.shape_cast %68 : vector<4x1x16xf32> to vector<4x16xf32>
    %cst_84 = arith.constant dense<0.000000e+00> : vector<8x16xf32>
    %70 = tpu.matmul %67, %69, %cst_84 {dimension_numbers = #tpu.dot_dimension_numbers<[1], [0], [0], [1], [0, 0, 1, 1], [], []>} : vector<8x4xf32>, vector<4x16xf32>, vector<8x16xf32> -> vector<8x16xf32>
    %c0_85 = arith.constant 0 : index
    %c0_86 = arith.constant 0 : index
    %c0_87 = arith.constant 0 : index
    %c80 = arith.constant 80 : index
    %71 = vector.load %arg7[%c0_85, %c0_86, %c0_87, %c80] : memref<1x1x8x128xf32, #tpu.memory_space<vmem>>, vector<1x1x8x16xf32>
    %72 = vector.shape_cast %71 : vector<1x1x8x16xf32> to vector<8x16xf32>
    %73 = vector.shape_cast %70 : vector<8x16xf32> to vector<1x1x8x16xf32>
    tpu.vector_store %arg7[%c0_85, %c0_86, %c0_87, %c80], %73 {strides = array<i32>} : memref<1x1x8x128xf32, #tpu.memory_space<vmem>>, vector<1x1x8x16xf32>,
    %c0_88 = arith.constant 0 : index
    %c0_89 = arith.constant 0 : index
    %74 = vector.load %arg5[%c0_88, %c0_89] : memref<8x4xf32, #tpu.memory_space<vmem>>, vector<8x4xf32>
    %c0_90 = arith.constant 0 : index
    %c6 = arith.constant 6 : index
    %c0_91 = arith.constant 0 : index
    %75 = vector.load %arg9[%c0_90, %c6, %c0_91] : memref<4x8x16xf32, #tpu.memory_space<vmem>>, vector<4x1x16xf32>
    %76 = vector.shape_cast %75 : vector<4x1x16xf32> to vector<4x16xf32>
    %cst_92 = arith.constant dense<0.000000e+00> : vector<8x16xf32>
    %77 = tpu.matmul %74, %76, %cst_92 {dimension_numbers = #tpu.dot_dimension_numbers<[1], [0], [0], [1], [0, 0, 1, 1], [], []>} : vector<8x4xf32>, vector<4x16xf32>, vector<8x16xf32> -> vector<8x16xf32>
    %c0_93 = arith.constant 0 : index
    %c0_94 = arith.constant 0 : index
    %c0_95 = arith.constant 0 : index
    %c96 = arith.constant 96 : index
    %78 = vector.load %arg7[%c0_93, %c0_94, %c0_95, %c96] : memref<1x1x8x128xf32, #tpu.memory_space<vmem>>, vector<1x1x8x16xf32>
    %79 = vector.shape_cast %78 : vector<1x1x8x16xf32> to vector<8x16xf32>
    %80 = vector.shape_cast %77 : vector<8x16xf32> to vector<1x1x8x16xf32>
    tpu.vector_store %arg7[%c0_93, %c0_94, %c0_95, %c96], %80 {strides = array<i32>} : memref<1x1x8x128xf32, #tpu.memory_space<vmem>>, vector<1x1x8x16xf32>,
    %c0_96 = arith.constant 0 : index
    %c0_97 = arith.constant 0 : index
    %81 = vector.load %arg5[%c0_96, %c0_97] : memref<8x4xf32, #tpu.memory_space<vmem>>, vector<8x4xf32>
    %c0_98 = arith.constant 0 : index
    %c7 = arith.constant 7 : index
    %c0_99 = arith.constant 0 : index
    %82 = vector.load %arg9[%c0_98, %c7, %c0_99] : memref<4x8x16xf32, #tpu.memory_space<vmem>>, vector<4x1x16xf32>
    %83 = vector.shape_cast %82 : vector<4x1x16xf32> to vector<4x16xf32>
    %cst_100 = arith.constant dense<0.000000e+00> : vector<8x16xf32>
    %84 = tpu.matmul %81, %83, %cst_100 {dimension_numbers = #tpu.dot_dimension_numbers<[1], [0], [0], [1], [0, 0, 1, 1], [], []>} : vector<8x4xf32>, vector<4x16xf32>, vector<8x16xf32> -> vector<8x16xf32>
    %c0_101 = arith.constant 0 : index
    %c0_102 = arith.constant 0 : index
    %c0_103 = arith.constant 0 : index
    %c112 = arith.constant 112 : index
    %85 = vector.load %arg7[%c0_101, %c0_102, %c0_103, %c112] : memref<1x1x8x128xf32, #tpu.memory_space<vmem>>, vector<1x1x8x16xf32>
    %86 = vector.shape_cast %85 : vector<1x1x8x16xf32> to vector<8x16xf32>
    %87 = vector.shape_cast %84 : vector<8x16xf32> to vector<1x1x8x16xf32>
    tpu.vector_store %arg7[%c0_101, %c0_102, %c0_103, %c112], %87 {strides = array<i32>} : memref<1x1x8x128xf32, #tpu.memory_space<vmem>>, vector<1x1x8x16xf32>,
    return
  }
  func.func @transform_0(%arg0: i32, %arg1: i32) -> (i32, i32, i32) {
    %c0_i32 = arith.constant 0 : i32
    %c0_i32_0 = arith.constant 0 : i32
    %c0_i32_1 = arith.constant 0 : i32
    return %arg0, %c0_i32, %c0_i32_0 : i32, i32, i32
  }
  func.func @transform_1(%arg0: i32, %arg1: i32) -> (i32, i32) {
    %c0_i32 = arith.constant 0 : i32
    %c0_i32_0 = arith.constant 0 : i32
    return %c0_i32, %arg1 : i32, i32
  }
  func.func @transform_2(%arg0: i32, %arg1: i32) -> (i32, i32) {
    %c0_i32 = arith.constant 0 : i32
    %c0_i32_0 = arith.constant 0 : i32
    return %c0_i32, %arg1 : i32, i32
  }
  func.func @transform_3(%arg0: i32, %arg1: i32) -> (i32, i32) {
    %c0_i32 = arith.constant 0 : i32
    %c0_i32_0 = arith.constant 0 : i32
    %c0_i32_1 = arith.constant 0 : i32
    return %c0_i32, %c0_i32_0 : i32, i32
  }
  func.func @transform_4(%arg0: i32, %arg1: i32) -> (i32, i32) {
    %c0_i32 = arith.constant 0 : i32
    %c0_i32_0 = arith.constant 0 : i32
    %c0_i32_1 = arith.constant 0 : i32
    return %c0_i32, %c0_i32_0 : i32, i32
  }
  func.func @transform_5(%arg0: i32, %arg1: i32) -> (i32, i32, i32, i32) {
    %c0_i32 = arith.constant 0 : i32
    %c0_i32_0 = arith.constant 0 : i32
    %c0_i32_1 = arith.constant 0 : i32
    return %arg0, %arg1, %c0_i32, %c0_i32_0 : i32, i32, i32, i32
  }
}

</mosaic_0001>

<llo_original>
// kernel: tpu_custom_call.1
$region0: #{tpu_custom_call.1}
  #allocation0 [shape = 'u32[]', space=smem, size = 0x4, offset = 0x4, fixed_abs, tag = 'smem constant byte address 0x4 - core index']
  #allocation1 [shape = 'u32[144,128]{1,0:T(1,128)}', space=vmem, size = 0x12000, scoped, tag = 'internal scratch']
  #allocation2 [shape = 'f32[17,16]{1,0:T(8,128)}', space=vmem, size = 0x3000, scoped, tag = 'scratch operand']
  #allocation3 [shape = 'f32[4,8,16]{2,1,0:T(8,128)}', space=vmem, size = 0x4000, scoped, tag = 'scratch operand']
  %s0 = inlined_call_operand.vmem [shape: f32[2,17,32], index: 0, kind: input, shape index: {}]
  %s1 = inlined_call_operand.vmem [shape: f32[32,16], index: 1, kind: input, shape index: {}]
  %s2 = inlined_call_operand.vmem [shape: f32[1,16], index: 2, kind: input, shape index: {}]
  %s3 = inlined_call_operand.vmem [shape: f32[8,4], index: 3, kind: input, shape index: {}]
  %s4 = inlined_call_operand.vmem [shape: f32[8,4], index: 4, kind: input, shape index: {}]
  %s5 = inlined_call_operand.hbm [shape: f32[2,1,8,128], index: 5, kind: output, shape index: {}]
  %s6 = sld [smem:[#allocation0]]
  $region53: #{tpu_custom_call.1} parent=0
    _
  %s8 = ssub.s32 1, %s6
  %s9 = scalar_select 0, %s8, %s6
  $region1: #{tpu_custom_call.1} parent=0
    #allocation4 [shape = 'u8[8192]{0}', space=vmem, size = 0x2000, scoped, tag = 'output window, operand 0']
    #allocation5 [shape = 's32[2]{0}', space=sflag, size = 0x8, scoped, tag = 'scoped memory for tpu_custom_call.1']
    %10 = vsyncpa [#allocation5], 0
    %s11 = scalar_lea.sflag [#allocation5], 1
    %12 = vsyncpa %s11, 0
    loop: start=0, step=1, limit=4
    $region2: #{tpu_custom_call.1} parent=1 // loop_pre_header
      _
    $region3: #{tpu_custom_call.1} parent=1 // loop_header
      %s14 = sphi 0, %s18
      %p15 = scmp.ge.s32.totalorder %s14, 4
      %s21 = sphi 0, %s33
      %s22 = sphi 0, %s29
      %s23 = sphi 0, %s21
      %s24 = sphi 0, %s22
      %s25 = sphi 0, %s23
      %s26 = sphi 0, %s24
      %s36 = sphi 0, %s38
      %s39 = sphi 0, %s36
      %s40 = sphi 0, %s39
      %s56 = sphi 0, %s40
      %s62 = sphi 0, %s64
      %s65 = sphi 0, %s62
      %s66 = sphi 0, %s65
      %s82 = sphi 0, %s66
      %s88 = sphi 0, %s90
      %s91 = sphi 0, %s88
      %s92 = sphi 0, %s91
      %s108 = sphi 0, %s92
      %s112 = sphi 0, %s112
      %s114 = sphi 0, %s112
      %s115 = sphi 0, %s114
      %s129 = sphi 0, %s115
      %s133 = sphi 0, %s133
      %s135 = sphi 0, %s133
      %s136 = sphi 0, %s135
      %s150 = sphi 0, %s136
      %s158 = sphi 0, %s160
      %s161 = sphi 0, %s158
      %s162 = sphi 0, %s161
      %s178 = sphi 0, %s162
    $region4: #{tpu_custom_call.1} parent=1 // loop_header_branch
      %17 = sbr.rel (%p15) target = $region8
    $region5: #{tpu_custom_call.1} parent=1 // loop_body
      %s19 = ssub.s32 %s14, 1
      %s20 = ssub.s32 %s14, 2
      %s27 = sadd.s32 1, %s22
      %p28 = scmp.ge.s32.totalorder %s27, 1
      %s29 = scalar_select %p28, 0, %s27
      %s30 = sadd.s32 1, %s21
      %s31 = scalar_select %p28, %s30, %s21
      %p32 = scmp.ge.s32.totalorder %s31, 2
      %s33 = scalar_select %p32, 0, %s31
      %s34 = ssub.s32 %s21, %s33
      %p35 = scmp.eq.s32.totalorder %s34, 0
      %s37 = sadd.s32 %s36, 1
      %s38 = scalar_select %p35, %s36, %s37
      %p41 = pneg %p35
      %p42 = scmp.eq.s32.totalorder %s14, 1
      %p43 = por %p41, %p42
      %p44 = scmp.ne.s32.totalorder %s36, %s39
      %p45 = scmp.eq.s32.totalorder %s14, 0
      %p46 = por %p44, %p45
      %p47 = scmp.ne.s32.totalorder %s36, %s39
      %p48 = scmp.eq.s32.totalorder %s19, 1
      %p49 = por %p47, %p48
      %p50 = scmp.ne.s32.totalorder %s39, %s40
      %p51 = scmp.eq.s32.totalorder %s19, 0
      %p52 = por %p50, %p51
      %p53 = scmp.ne.s32.totalorder %s39, %s40
      %p54 = scmp.eq.s32.totalorder %s20, 1
      %p55 = por %p53, %p54
      %p57 = scmp.ne.s32.totalorder %s40, %s56
      %p58 = scmp.eq.s32.totalorder %s20, 0
      %p59 = por %p57, %p58
      %s60 = ssub.s32 %s22, %s29
      %p61 = scmp.eq.s32.totalorder %s60, 0
      %s63 = sadd.s32 %s62, 1
      %s64 = scalar_select %p61, %s62, %s63
      %p67 = pneg %p61
      %p68 = scmp.eq.s32.totalorder %s14, 1
      %p69 = por %p67, %p68
      %p70 = scmp.ne.s32.totalorder %s62, %s65
      %p71 = scmp.eq.s32.totalorder %s14, 0
      %p72 = por %p70, %p71
      %p73 = scmp.ne.s32.totalorder %s62, %s65
      %p74 = scmp.eq.s32.totalorder %s19, 1
      %p75 = por %p73, %p74
      %p76 = scmp.ne.s32.totalorder %s65, %s66
      %p77 = scmp.eq.s32.totalorder %s19, 0
      %p78 = por %p76, %p77
      %p79 = scmp.ne.s32.totalorder %s65, %s66
      %p80 = scmp.eq.s32.totalorder %s20, 1
      %p81 = por %p79, %p80
      %p83 = scmp.ne.s32.totalorder %s66, %s82
      %p84 = scmp.eq.s32.totalorder %s20, 0
      %p85 = por %p83, %p84
      %s86 = ssub.s32 %s22, %s29
      %p87 = scmp.eq.s32.totalorder %s86, 0
      %s89 = sadd.s32 %s88, 1
      %s90 = scalar_select %p87, %s88, %s89
      %p93 = pneg %p87
      %p94 = scmp.eq.s32.totalorder %s14, 1
      %p95 = por %p93, %p94
      %p96 = scmp.ne.s32.totalorder %s88, %s91
      %p97 = scmp.eq.s32.totalorder %s14, 0
      %p98 = por %p96, %p97
      %p99 = scmp.ne.s32.totalorder %s88, %s91
      %p100 = scmp.eq.s32.totalorder %s19, 1
      %p101 = por %p99, %p100
      %p102 = scmp.ne.s32.totalorder %s91, %s92
      %p103 = scmp.eq.s32.totalorder %s19, 0
      %p104 = por %p102, %p103
      %p105 = scmp.ne.s32.totalorder %s91, %s92
      %p106 = scmp.eq.s32.totalorder %s20, 1
      %p107 = por %p105, %p106
      %p109 = scmp.ne.s32.totalorder %s92, %s108
      %p110 = scmp.eq.s32.totalorder %s20, 0
      %p111 = por %p109, %p110
      %s113 = sadd.s32 %s112, 1
      %p116 = scmp.eq.s32.totalorder %s14, 1
      %p117 = scmp.ne.s32.totalorder %s112, %s114
      %p118 = scmp.eq.s32.totalorder %s14, 0
      %p119 = por %p117, %p118
      %p120 = scmp.ne.s32.totalorder %s112, %s114
      %p121 = scmp.eq.s32.totalorder %s19, 1
      %p122 = por %p120, %p121
      %p123 = scmp.ne.s32.totalorder %s114, %s115
      %p124 = scmp.eq.s32.totalorder %s19, 0
      %p125 = por %p123, %p124
      %p126 = scmp.ne.s32.totalorder %s114, %s115
      %p127 = scmp.eq.s32.totalorder %s20, 1
      %p128 = por %p126, %p127
      %p130 = scmp.ne.s32.totalorder %s115, %s129
      %p131 = scmp.eq.s32.totalorder %s20, 0
      %p132 = por %p130, %p131
      %s134 = sadd.s32 %s133, 1
      %p137 = scmp.eq.s32.totalorder %s14, 1
      %p138 = scmp.ne.s32.totalorder %s133, %s135
      %p139 = scmp.eq.s32.totalorder %s14, 0
      %p140 = por %p138, %p139
      %p141 = scmp.ne.s32.totalorder %s133, %s135
      %p142 = scmp.eq.s32.totalorder %s19, 1
      %p143 = por %p141, %p142
      %p144 = scmp.ne.s32.totalorder %s135, %s136
      %p145 = scmp.eq.s32.totalorder %s19, 0
      %p146 = por %p144, %p145
      %p147 = scmp.ne.s32.totalorder %s135, %s136
      %p148 = scmp.eq.s32.totalorder %s20, 1
      %p149 = por %p147, %p148
      %p151 = scmp.ne.s32.totalorder %s136, %s150
      %p152 = scmp.eq.s32.totalorder %s20, 0
      %p153 = por %p151, %p152
      %s154 = ssub.s32 %s21, %s33
      %s155 = ssub.s32 %s22, %s29
      %s156 = sor.u32 %s154, %s155
      %p157 = scmp.eq.s32.totalorder %s156, 0
      %s159 = sadd.s32 %s158, 1
      %s160 = scalar_select %p157, %s158, %s159
      %p163 = pneg %p157
      %p164 = scmp.eq.s32.totalorder %s14, 1
      %p165 = por %p163, %p164
      %p166 = scmp.ne.s32.totalorder %s158, %s161
      %p167 = scmp.eq.s32.totalorder %s14, 0
      %p168 = por %p166, %p167
      %p169 = scmp.ne.s32.totalorder %s158, %s161
      %p170 = scmp.eq.s32.totalorder %s19, 1
      %p171 = por %p169, %p170
      %p172 = scmp.ne.s32.totalorder %s161, %s162
      %p173 = scmp.eq.s32.totalorder %s19, 0
      %p174 = por %p172, %p173
      %p175 = scmp.ne.s32.totalorder %s161, %s162
      %p176 = scmp.eq.s32.totalorder %s20, 1
      %p177 = por %p175, %p176
      %p179 = scmp.ne.s32.totalorder %s162, %s178
      %p180 = scmp.eq.s32.totalorder %s20, 0
      %p181 = por %p179, %p180
      %p182 = scmp.le.s32.totalorder 1, %s14
      %p183 = scmp.lt.s32.totalorder %s14, 3
      %p184 = pnand %p182, %p183
      %p185 = pneg %p184
      // Predicated region
      $region9: #{tpu_custom_call.1} parent=5 // pred_check
        _
      $region10: #{tpu_custom_call.1} parent=5 // pred_check_branch
        %187 = sbr.rel (%p184) target = $region12
      $region11: #{tpu_custom_call.1} parent=5 // pred_region
        %s188 = ssub.s32 %s14, 1
        // Predicated region
        $region13: #{tpu_custom_call.1} parent=11 // pred_check
          %p189 = pneg %p78
        $region14: #{tpu_custom_call.1} parent=11 // pred_check_branch
          %191 = sbr.rel (%p189) target = $region16
        $region15: #{tpu_custom_call.1} parent=11 // pred_region
          %p192 = scmp.lt.s32.totalorder %s24, 0
          %s193 = scalar_select %p192, %s24, 0
          %s194 = smul.addr %s193, 8
          %s195 = scalar_lea.vmem %s1, %s194
        $region16: #{tpu_custom_call.1} parent=11 // pred_fallthru
          _
        // Predicated region
        $region17: #{tpu_custom_call.1} parent=11 // pred_check
          %p196 = pneg %p104
        $region18: #{tpu_custom_call.1} parent=11 // pred_check_branch
          %198 = sbr.rel (%p196) target = $region20
        $region19: #{tpu_custom_call.1} parent=11 // pred_region
          %p199 = scmp.lt.s32.totalorder %s24, 0
          %s200 = scalar_select %p199, %s24, 0
          %s201 = scalar_lea.vmem %s2, %s200
        $region20: #{tpu_custom_call.1} parent=11 // pred_fallthru
          _
        // Predicated region
        $region21: #{tpu_custom_call.1} parent=11 // pred_check
          %p202 = pneg %p125
        $region22: #{tpu_custom_call.1} parent=11 // pred_check_branch
          %204 = sbr.rel (%p202) target = $region24
        $region23: #{tpu_custom_call.1} parent=11 // pred_region
          _
        $region24: #{tpu_custom_call.1} parent=11 // pred_fallthru
          _
        // Predicated region
        $region25: #{tpu_custom_call.1} parent=11 // pred_check
          %p205 = pneg %p146
        $region26: #{tpu_custom_call.1} parent=11 // pred_check_branch
          %207 = sbr.rel (%p205) target = $region28
        $region27: #{tpu_custom_call.1} parent=11 // pred_region
          _
        $region28: #{tpu_custom_call.1} parent=11 // pred_fallthru
          _
      $region12: #{tpu_custom_call.1} parent=5 // pred_fallthru
        _
      %p208 = scmp.lt.s32.totalorder %s14, 2
      // Predicated region
      $region29: #{tpu_custom_call.1} parent=5 // pred_check
        %p209 = pneg %p208
      $region30: #{tpu_custom_call.1} parent=5 // pred_check_branch
        %211 = sbr.rel (%p209) target = $region32
      $region31: #{tpu_custom_call.1} parent=5 // pred_region
        // Predicated region
        $region33: #{tpu_custom_call.1} parent=31 // pred_check
          %p212 = pneg %p46
        $region34: #{tpu_custom_call.1} parent=31 // pred_check_branch
          %214 = sbr.rel (%p212) target = $region36
        $region35: #{tpu_custom_call.1} parent=31 // pred_region
          %p215 = scmp.lt.s32.totalorder %s21, 1
          %s216 = scalar_select %p215, %s21, 1
          %s217 = smul.addr %s216, 3
          %s218 = smul.addr %s217, 8
          %s219 = scalar_lea.vmem %s0, %s218
        $region36: #{tpu_custom_call.1} parent=31 // pred_fallthru
          _
      $region32: #{tpu_custom_call.1} parent=5 // pred_fallthru
        _
      %p220 = scmp.le.s32.totalorder 1, %s14
      %p221 = scmp.lt.s32.totalorder %s14, 3
      %p222 = pnand %p220, %p221
      %p223 = pneg %p222
      // Predicated region
      $region37: #{tpu_custom_call.1} parent=5 // pred_check
        _
      $region38: #{tpu_custom_call.1} parent=5 // pred_check_branch
        %225 = sbr.rel (%p222) target = $region40
      $region39: #{tpu_custom_call.1} parent=5 // pred_region
        %s226 = ssub.s32 %s14, 1
        %p227 = scmp.lt.s32.totalorder %s23, 1
        %s228 = scalar_select %p227, %s23, 1
        %s229 = smul.addr %s228, 3
        %s230 = smul.addr %s229, 8
        %s231 = scalar_lea.vmem %s0, %s230
        %p232 = pneg %p52
        %p233 = pneg %p49
        %p234 = scmp.lt.s32.totalorder %s24, 0
        %s235 = scalar_select %p234, %s24, 0
        %s236 = smul.addr %s235, 8
        %s237 = scalar_lea.vmem %s1, %s236
        %p238 = pneg %p78
        %p239 = pneg %p75
        %p240 = scmp.lt.s32.totalorder %s24, 0
        %s241 = scalar_select %p240, %s24, 0
        %s242 = scalar_lea.vmem %s2, %s241
        %p243 = pneg %p104
        %p244 = pneg %p101
        %p245 = pneg %p125
        %p246 = pneg %p122
        %p247 = pneg %p146
        %p248 = pneg %p143
        %p249 = pneg %p174
        %p250 = pneg %p171
        %s251 = sand.u32 %s161, 1
        %s252 = scalar_lea.sflag [#allocation5], %s251
        %s253 = sand.u32 %s161, 1
        %s254 = smul.addr %s253, 8
        %s255 = scalar_lea.vmem [#allocation4], %s254
        %p256 = scmp.lt.s32.totalorder %s23, 1
        %s257 = scalar_select %p256, %s23, 1
        %s258 = smul.addr %s257, 3
        %s259 = smul.addr %s258, 8
        %s260 = scalar_lea.vmem %s0, %s259
        %p261 = scmp.lt.s32.totalorder %s24, 0
        %s262 = scalar_select %p261, %s24, 0
        %s263 = smul.addr %s262, 8
        %s264 = scalar_lea.vmem %s1, %s263
        %p265 = scmp.lt.s32.totalorder %s24, 0
        %s266 = scalar_select %p265, %s24, 0
        %s267 = scalar_lea.vmem %s2, %s266
        %v268 = vld [vmem:[%s260] sm:$0xff]
        %v269 = vld [vmem:[%s260 + $0x8] sm:$0xff]
        %v270 = vld [vmem:[%s260 + $0x10] sm:$0x1]
        %v271 = vld [vmem:[%s264] sm:$0xff]
        %v272 = vld [vmem:[%s264 + $0x8] sm:$0xff]
        %v273 = vld [vmem:[%s264 + $0x10] sm:$0xff]
        %v274 = vld [vmem:[%s264 + $0x18] sm:$0xff]
        %v275 = vld [vmem:[%s267] sm:$0x1]
        %v277 = vlaneseq
        %v278 = vshrl.u32 %v277, 7
        %v279 = vsub.s32 0, %v278
        %v280 = vrot.slane %v275, %v279
        %vm282 = vcmask 261120
        %v284 = vsel %vm282, %v268, 0
        %v287 = vsel %vm282, %v269, 0
        %v290 = vsel %vm282, %v270, 0
        %292 = vmatprep.subr.mxu0 0.0
        %293 = vmatpush1.msra.mxu0 %v271
        %294 = vmatprep.subr.mxu0 0.0
        %295 = vmatpush1.msra.mxu0 %v272
        %296 = vmatprep.subr.mxu0 0.0
        %297 = vmatpush1.msra.mxu0 %v273
        %298 = vmatprep.subr.mxu0 0.0
        %299 = vmatpush1.msra.mxu0 %v274
        %300 = vmatprep.subr.mxu0 0.0
        %301 = vmatpush1.msra.mxu0 0.0
        %302 = vmatprep.subr.mxu0 0.0
        %303 = vmatpush1.msra.mxu0 0.0
        %304 = vmatprep.subr.mxu0 0.0
        %305 = vmatpush1.msra.mxu0 0.0
        %306 = vmatprep.subr.mxu0 0.0
        %307 = vmatpush1.msra.mxu0 0.0
        %308 = vmatprep.subr.mxu0 0.0
        %309 = vmatpush1.msra.mxu0 0.0
        %310 = vmatprep.subr.mxu0 0.0
        %311 = vmatpush1.msra.mxu0 0.0
        %312 = vmatprep.subr.mxu0 0.0
        %313 = vmatpush1.msra.mxu0 0.0
        %314 = vmatprep.subr.mxu0 0.0
        %315 = vmatpush1.msra.mxu0 0.0
        %316 = vmatprep.subr.mxu0 0.0
        %317 = vmatpush1.msra.mxu0 0.0
        %318 = vmatprep.subr.mxu0 0.0
        %319 = vmatpush1.msra.mxu0 0.0
        %320 = vmatprep.subr.mxu0 0.0
        %321 = vmatpush1.msra.mxu0 0.0
        %322 = vmatprep.subr.mxu0 0.0
        %323 = vmatpush1.msra.mxu0 0.0
        %324 = vmatprep.subr.mxu0 0.0
        %325 = vmatpush1.msra.mxu0 0.0
        %326 = vmatprep.subr.mxu0 0.0
        %327 = vmatpush1.msra.mxu0 0.0
        %328 = vmatprep.subr.mxu0 0.0
        %329 = vmatpush1.msra.mxu0 0.0
        %330 = vmatprep.subr.mxu0 0.0
        %331 = vmatpush1.msra.mxu0 0.0
        %332 = vmatprep.subr.mxu0 0.0
        %333 = vmatpush1.msra.mxu0 0.0
        %334 = vmatprep.subr.mxu0 0.0
        %335 = vmatpush1.msra.mxu0 0.0
        %336 = vmatprep.subr.mxu0 0.0
        %337 = vmatpush1.msra.mxu0 0.0
        %338 = vmatprep.subr.mxu0 0.0
        %339 = vmatpush1.msra.mxu0 0.0
        %340 = vmatprep.subr.mxu0 0.0
        %341 = vmatpush1.msra.mxu0 0.0
        %342 = vmatprep.subr.mxu0 0.0
        %343 = vmatpush1.msra.mxu0 0.0
        %344 = vmatprep.subr.mxu0 0.0
        %345 = vmatpush1.msra.mxu0 0.0
        %346 = vmatprep.subr.mxu0 0.0
        %347 = vmatpush1.msra.mxu0 0.0
        %348 = vmatprep.subr.mxu0 0.0
        %349 = vmatpush1.msra.mxu0 0.0
        %350 = vmatprep.subr.mxu0 0.0
        %351 = vmatpush1.msra.mxu0 0.0
        %352 = vmatprep.subr.mxu0 0.0
        %353 = vmatpush1.msra.mxu0 0.0
        %354 = vmatprep.subr.mxu0 0.0
        %355 = vmatpush1.msra.mxu0 0.0
        %356 = vmatprep.mubr.f32.mxu0 0.0
        %357 = vmatmul.mubr.f32.gmra.mrb[0].mxu0 %v284
        %v358 = vpop.f32.mrb[0].mxu0
        %v359 = vadd.f32 %v280, %v358
        %v360 = vpop.f32.mrb[0].mxu0
        %361 = vmatprep.mubr.f32.mxu0 0.0
        %362 = vmatmul.mubr.f32.gmra.mrb[0].mxu0 %v287
        %v363 = vpop.f32.mrb[0].mxu0
        %v364 = vadd.f32 %v280, %v363
        %v365 = vpop.f32.mrb[0].mxu0
        %366 = vmatprep.mubr.f32.mxu0 0.0
        %367 = vmatmul.mubr.f32.gmra.mrb[0].mxu0 %v290
        %v368 = vpop.f32.mrb[0].mxu0
        %v369 = vadd.f32 %v280, %v368
        %v370 = vpop.f32.mrb[0].mxu0
        %371 = vdwg.mxu0
        %vm372 = vcmask 130048
        %373 = vst.msk [vmem:[#allocation2] sm:$0xff] %vm372, %v359
        %374 = vst.msk [vmem:[#allocation2 + $0x8] sm:$0xff] %vm372, %v364
        %vm375 = vcmask 122880
        %376 = vst.msk [vmem:[#allocation2 + $0x10] sm:$0x1] %vm375, %v369
        %v377 = vld [vmem:[%s4] sm:$0xff]
        %v378 = vld [vmem:[#allocation2 + $0x1] sm:$0xf]
        %vm379 = vcmask 31744
        %v381 = vsel %vm379, %v377, 0
        %vm383 = vcmask 1043456
        %v385 = vsel %vm383, %v378, 0
        %387 = vmatprep.subr.mxu0 0.0
        %388 = vmatpush1.msra.mxu0 %v385
        %389 = vmatprep.subr.mxu0 0.0
        %390 = vmatpush1.msra.mxu0 0.0
        %391 = vmatprep.subr.mxu0 0.0
        %392 = vmatpush1.msra.mxu0 0.0
        %393 = vmatprep.subr.mxu0 0.0
        %394 = vmatpush1.msra.mxu0 0.0
        %395 = vmatprep.subr.mxu0 0.0
        %396 = vmatpush1.msra.mxu0 0.0
        %397 = vmatprep.subr.mxu0 0.0
        %398 = vmatpush1.msra.mxu0 0.0
        %399 = vmatprep.subr.mxu0 0.0
        %400 = vmatpush1.msra.mxu0 0.0
        %401 = vmatprep.subr.mxu0 0.0
        %402 = vmatpush1.msra.mxu0 0.0
        %403 = vmatprep.subr.mxu0 0.0
        %404 = vmatpush1.msra.mxu0 0.0
        %405 = vmatprep.subr.mxu0 0.0
        %406 = vmatpush1.msra.mxu0 0.0
        %407 = vmatprep.subr.mxu0 0.0
        %408 = vmatpush1.msra.mxu0 0.0
        %409 = vmatprep.subr.mxu0 0.0
        %410 = vmatpush1.msra.mxu0 0.0
        %411 = vmatprep.subr.mxu0 0.0
        %412 = vmatpush1.msra.mxu0 0.0
        %413 = vmatprep.subr.mxu0 0.0
        %414 = vmatpush1.msra.mxu0 0.0
        %415 = vmatprep.subr.mxu0 0.0
        %416 = vmatpush1.msra.mxu0 0.0
        %417 = vmatprep.subr.mxu0 0.0
        %418 = vmatpush1.msra.mxu0 0.0
        %419 = vmatprep.subr.mxu0 0.0
        %420 = vmatpush1.msra.mxu0 0.0
        %421 = vmatprep.subr.mxu0 0.0
        %422 = vmatpush1.msra.mxu0 0.0
        %423 = vmatprep.subr.mxu0 0.0
        %424 = vmatpush1.msra.mxu0 0.0
        %425 = vmatprep.subr.mxu0 0.0
        %426 = vmatpush1.msra.mxu0 0.0
        %427 = vmatprep.subr.mxu0 0.0
        %428 = vmatpush1.msra.mxu0 0.0
        %429 = vmatprep.subr.mxu0 0.0
        %430 = vmatpush1.msra.mxu0 0.0
        %431 = vmatprep.subr.mxu0 0.0
        %432 = vmatpush1.msra.mxu0 0.0
        %433 = vmatprep.subr.mxu0 0.0
        %434 = vmatpush1.msra.mxu0 0.0
        %435 = vmatprep.subr.mxu0 0.0
        %436 = vmatpush1.msra.mxu0 0.0
        %437 = vmatprep.subr.mxu0 0.0
        %438 = vmatpush1.msra.mxu0 0.0
        %439 = vmatprep.subr.mxu0 0.0
        %440 = vmatpush1.msra.mxu0 0.0
        %441 = vmatprep.subr.mxu0 0.0
        %442 = vmatpush1.msra.mxu0 0.0
        %443 = vmatprep.subr.mxu0 0.0
        %444 = vmatpush1.msra.mxu0 0.0
        %445 = vmatprep.subr.mxu0 0.0
        %446 = vmatpush1.msra.mxu0 0.0
        %447 = vmatprep.subr.mxu0 0.0
        %448 = vmatpush1.msra.mxu0 0.0
        %449 = vmatprep.subr.mxu0 0.0
        %450 = vmatpush1.msra.mxu0 0.0
        %451 = vmatprep.mubr.f32.mxu0 0.0
        %452 = vmatmul.mubr.f32.gmra.mrb[0].mxu0 %v381
        %v453 = vpop.f32.mrb[0].mxu0
        %v454 = vadd.f32 0.0, %v453
        %v455 = vpop.f32.mrb[0].mxu0
        %456 = vdwg.mxu0
        %457 = vst.msk [vmem:[#allocation3] sm:$0xff] %vm372, %v454
        %v458 = vld [vmem:[%s4] sm:$0xff]
        %v459 = vld [vmem:[#allocation2 + $0x5] sm:$0xf]
        %v461 = vsel %vm379, %v458, 0
        %v464 = vsel %vm383, %v459, 0
        %466 = vmatprep.subr.mxu0 0.0
        %467 = vmatpush1.msra.mxu0 %v464
        %468 = vmatprep.subr.mxu0 0.0
        %469 = vmatpush1.msra.mxu0 0.0
        %470 = vmatprep.subr.mxu0 0.0
        %471 = vmatpush1.msra.mxu0 0.0
        %472 = vmatprep.subr.mxu0 0.0
        %473 = vmatpush1.msra.mxu0 0.0
        %474 = vmatprep.subr.mxu0 0.0
        %475 = vmatpush1.msra.mxu0 0.0
        %476 = vmatprep.subr.mxu0 0.0
        %477 = vmatpush1.msra.mxu0 0.0
        %478 = vmatprep.subr.mxu0 0.0
        %479 = vmatpush1.msra.mxu0 0.0
        %480 = vmatprep.subr.mxu0 0.0
        %481 = vmatpush1.msra.mxu0 0.0
        %482 = vmatprep.subr.mxu0 0.0
        %483 = vmatpush1.msra.mxu0 0.0
        %484 = vmatprep.subr.mxu0 0.0
        %485 = vmatpush1.msra.mxu0 0.0
        %486 = vmatprep.subr.mxu0 0.0
        %487 = vmatpush1.msra.mxu0 0.0
        %488 = vmatprep.subr.mxu0 0.0
        %489 = vmatpush1.msra.mxu0 0.0
        %490 = vmatprep.subr.mxu0 0.0
        %491 = vmatpush1.msra.mxu0 0.0
        %492 = vmatprep.subr.mxu0 0.0
        %493 = vmatpush1.msra.mxu0 0.0
        %494 = vmatprep.subr.mxu0 0.0
        %495 = vmatpush1.msra.mxu0 0.0
        %496 = vmatprep.subr.mxu0 0.0
        %497 = vmatpush1.msra.mxu0 0.0
        %498 = vmatprep.subr.mxu0 0.0
        %499 = vmatpush1.msra.mxu0 0.0
        %500 = vmatprep.subr.mxu0 0.0
        %501 = vmatpush1.msra.mxu0 0.0
        %502 = vmatprep.subr.mxu0 0.0
        %503 = vmatpush1.msra.mxu0 0.0
        %504 = vmatprep.subr.mxu0 0.0
        %505 = vmatpush1.msra.mxu0 0.0
        %506 = vmatprep.subr.mxu0 0.0
        %507 = vmatpush1.msra.mxu0 0.0
        %508 = vmatprep.subr.mxu0 0.0
        %509 = vmatpush1.msra.mxu0 0.0
        %510 = vmatprep.subr.mxu0 0.0
        %511 = vmatpush1.msra.mxu0 0.0
        %512 = vmatprep.subr.mxu0 0.0
        %513 = vmatpush1.msra.mxu0 0.0
        %514 = vmatprep.subr.mxu0 0.0
        %515 = vmatpush1.msra.mxu0 0.0
        %516 = vmatprep.subr.mxu0 0.0
        %517 = vmatpush1.msra.mxu0 0.0
        %518 = vmatprep.subr.mxu0 0.0
        %519 = vmatpush1.msra.mxu0 0.0
        %520 = vmatprep.subr.mxu0 0.0
        %521 = vmatpush1.msra.mxu0 0.0
        %522 = vmatprep.subr.mxu0 0.0
        %523 = vmatpush1.msra.mxu0 0.0
        %524 = vmatprep.subr.mxu0 0.0
        %525 = vmatpush1.msra.mxu0 0.0
        %526 = vmatprep.subr.mxu0 0.0
        %527 = vmatpush1.msra.mxu0 0.0
        %528 = vmatprep.subr.mxu0 0.0
        %529 = vmatpush1.msra.mxu0 0.0
        %530 = vmatprep.mubr.f32.mxu0 0.0
        %531 = vmatmul.mubr.f32.gmra.mrb[0].mxu0 %v461
        %v532 = vpop.f32.mrb[0].mxu0
        %v533 = vadd.f32 0.0, %v532
        %v534 = vpop.f32.mrb[0].mxu0
        %535 = vdwg.mxu0
        %s536 = scalar_lea.vmem [#allocation3], 8
        %537 = vst.msk [vmem:[%s536] sm:$0xff] %vm372, %v533
        %v538 = vld [vmem:[%s4] sm:$0xff]
        %v539 = vld [vmem:[#allocation2 + $0x9] sm:$0xf]
        %v541 = vsel %vm379, %v538, 0
        %v544 = vsel %vm383, %v539, 0
        %546 = vmatprep.subr.mxu0 0.0
        %547 = vmatpush1.msra.mxu0 %v544
        %548 = vmatprep.subr.mxu0 0.0
        %549 = vmatpush1.msra.mxu0 0.0
        %550 = vmatprep.subr.mxu0 0.0
        %551 = vmatpush1.msra.mxu0 0.0
        %552 = vmatprep.subr.mxu0 0.0
        %553 = vmatpush1.msra.mxu0 0.0
        %554 = vmatprep.subr.mxu0 0.0
        %555 = vmatpush1.msra.mxu0 0.0
        %556 = vmatprep.subr.mxu0 0.0
        %557 = vmatpush1.msra.mxu0 0.0
        %558 = vmatprep.subr.mxu0 0.0
        %559 = vmatpush1.msra.mxu0 0.0
        %560 = vmatprep.subr.mxu0 0.0
        %561 = vmatpush1.msra.mxu0 0.0
        %562 = vmatprep.subr.mxu0 0.0
        %563 = vmatpush1.msra.mxu0 0.0
        %564 = vmatprep.subr.mxu0 0.0
        %565 = vmatpush1.msra.mxu0 0.0
        %566 = vmatprep.subr.mxu0 0.0
        %567 = vmatpush1.msra.mxu0 0.0
        %568 = vmatprep.subr.mxu0 0.0
        %569 = vmatpush1.msra.mxu0 0.0
        %570 = vmatprep.subr.mxu0 0.0
        %571 = vmatpush1.msra.mxu0 0.0
        %572 = vmatprep.subr.mxu0 0.0
        %573 = vmatpush1.msra.mxu0 0.0
        %574 = vmatprep.subr.mxu0 0.0
        %575 = vmatpush1.msra.mxu0 0.0
        %576 = vmatprep.subr.mxu0 0.0
        %577 = vmatpush1.msra.mxu0 0.0
        %578 = vmatprep.subr.mxu0 0.0
        %579 = vmatpush1.msra.mxu0 0.0
        %580 = vmatprep.subr.mxu0 0.0
        %581 = vmatpush1.msra.mxu0 0.0
        %582 = vmatprep.subr.mxu0 0.0
        %583 = vmatpush1.msra.mxu0 0.0
        %584 = vmatprep.subr.mxu0 0.0
        %585 = vmatpush1.msra.mxu0 0.0
        %586 = vmatprep.subr.mxu0 0.0
        %587 = vmatpush1.msra.mxu0 0.0
        %588 = vmatprep.subr.mxu0 0.0
        %589 = vmatpush1.msra.mxu0 0.0
        %590 = vmatprep.subr.mxu0 0.0
        %591 = vmatpush1.msra.mxu0 0.0
        %592 = vmatprep.subr.mxu0 0.0
        %593 = vmatpush1.msra.mxu0 0.0
        %594 = vmatprep.subr.mxu0 0.0
        %595 = vmatpush1.msra.mxu0 0.0
        %596 = vmatprep.subr.mxu0 0.0
        %597 = vmatpush1.msra.mxu0 0.0
        %598 = vmatprep.subr.mxu0 0.0
        %599 = vmatpush1.msra.mxu0 0.0
        %600 = vmatprep.subr.mxu0 0.0
        %601 = vmatpush1.msra.mxu0 0.0
        %602 = vmatprep.subr.mxu0 0.0
        %603 = vmatpush1.msra.mxu0 0.0
        %604 = vmatprep.subr.mxu0 0.0
        %605 = vmatpush1.msra.mxu0 0.0
        %606 = vmatprep.subr.mxu0 0.0
        %607 = vmatpush1.msra.mxu0 0.0
        %608 = vmatprep.subr.mxu0 0.0
        %609 = vmatpush1.msra.mxu0 0.0
        %610 = vmatprep.mubr.f32.mxu0 0.0
        %611 = vmatmul.mubr.f32.gmra.mrb[0].mxu0 %v541
        %v612 = vpop.f32.mrb[0].mxu0
        %v613 = vadd.f32 0.0, %v612
        %v614 = vpop.f32.mrb[0].mxu0
        %615 = vdwg.mxu0
        %s616 = scalar_lea.vmem [#allocation3], 16
        %617 = vst.msk [vmem:[%s616] sm:$0xff] %vm372, %v613
        %v618 = vld [vmem:[%s4] sm:$0xff]
        %v619 = vld [vmem:[#allocation2 + $0xd] sm:$0xf]
        %v621 = vsel %vm379, %v618, 0
        %v624 = vsel %vm383, %v619, 0
        %626 = vmatprep.subr.mxu0 0.0
        %627 = vmatpush1.msra.mxu0 %v624
        %628 = vmatprep.subr.mxu0 0.0
        %629 = vmatpush1.msra.mxu0 0.0
        %630 = vmatprep.subr.mxu0 0.0
        %631 = vmatpush1.msra.mxu0 0.0
        %632 = vmatprep.subr.mxu0 0.0
        %633 = vmatpush1.msra.mxu0 0.0
        %634 = vmatprep.subr.mxu0 0.0
        %635 = vmatpush1.msra.mxu0 0.0
        %636 = vmatprep.subr.mxu0 0.0
        %637 = vmatpush1.msra.mxu0 0.0
        %638 = vmatprep.subr.mxu0 0.0
        %639 = vmatpush1.msra.mxu0 0.0
        %640 = vmatprep.subr.mxu0 0.0
        %641 = vmatpush1.msra.mxu0 0.0
        %642 = vmatprep.subr.mxu0 0.0
        %643 = vmatpush1.msra.mxu0 0.0
        %644 = vmatprep.subr.mxu0 0.0
        %645 = vmatpush1.msra.mxu0 0.0
        %646 = vmatprep.subr.mxu0 0.0
        %647 = vmatpush1.msra.mxu0 0.0
        %648 = vmatprep.subr.mxu0 0.0
        %649 = vmatpush1.msra.mxu0 0.0
        %650 = vmatprep.subr.mxu0 0.0
        %651 = vmatpush1.msra.mxu0 0.0
        %652 = vmatprep.subr.mxu0 0.0
        %653 = vmatpush1.msra.mxu0 0.0
        %654 = vmatprep.subr.mxu0 0.0
        %655 = vmatpush1.msra.mxu0 0.0
        %656 = vmatprep.subr.mxu0 0.0
        %657 = vmatpush1.msra.mxu0 0.0
        %658 = vmatprep.subr.mxu0 0.0
        %659 = vmatpush1.msra.mxu0 0.0
        %660 = vmatprep.subr.mxu0 0.0
        %661 = vmatpush1.msra.mxu0 0.0
        %662 = vmatprep.subr.mxu0 0.0
        %663 = vmatpush1.msra.mxu0 0.0
        %664 = vmatprep.subr.mxu0 0.0
        %665 = vmatpush1.msra.mxu0 0.0
        %666 = vmatprep.subr.mxu0 0.0
        %667 = vmatpush1.msra.mxu0 0.0
        %668 = vmatprep.subr.mxu0 0.0
        %669 = vmatpush1.msra.mxu0 0.0
        %670 = vmatprep.subr.mxu0 0.0
        %671 = vmatpush1.msra.mxu0 0.0
        %672 = vmatprep.subr.mxu0 0.0
        %673 = vmatpush1.msra.mxu0 0.0
        %674 = vmatprep.subr.mxu0 0.0
        %675 = vmatpush1.msra.mxu0 0.0
        %676 = vmatprep.subr.mxu0 0.0
        %677 = vmatpush1.msra.mxu0 0.0
        %678 = vmatprep.subr.mxu0 0.0
        %679 = vmatpush1.msra.mxu0 0.0
        %680 = vmatprep.subr.mxu0 0.0
        %681 = vmatpush1.msra.mxu0 0.0
        %682 = vmatprep.subr.mxu0 0.0
        %683 = vmatpush1.msra.mxu0 0.0
        %684 = vmatprep.subr.mxu0 0.0
        %685 = vmatpush1.msra.mxu0 0.0
        %686 = vmatprep.subr.mxu0 0.0
        %687 = vmatpush1.msra.mxu0 0.0
        %688 = vmatprep.subr.mxu0 0.0
        %689 = vmatpush1.msra.mxu0 0.0
        %690 = vmatprep.mubr.f32.mxu0 0.0
        %691 = vmatmul.mubr.f32.gmra.mrb[0].mxu0 %v621
        %v692 = vpop.f32.mrb[0].mxu0
        %v693 = vadd.f32 0.0, %v692
        %v694 = vpop.f32.mrb[0].mxu0
        %695 = vdwg.mxu0
        %s696 = scalar_lea.vmem [#allocation3], 24
        %697 = vst.msk [vmem:[%s696] sm:$0xff] %vm372, %v693
        %v698 = vld [vmem:[%s3] sm:$0xff]
        %v699 = vld [vmem:[#allocation3] sm:$0x1]
        %v700 = vld [vmem:[#allocation3 + $0x8] sm:$0x1]
        %v701 = vld [vmem:[#allocation3 + $0x10] sm:$0x1]
        %v702 = vld [vmem:[#allocation3 + $0x18] sm:$0x1]
        %v707 = vrot.slane %v700, 7
        %vm708 = vcmask 1041409
        %v709 = vsel %vm708, %v707, %v699
        %v710 = vrot.slane %v701, 6
        %vm711 = vcmask 1042434
        %v712 = vsel %vm711, %v710, %v709
        %v713 = vrot.slane %v702, 5
        %vm714 = vcmask 1043459
        %v715 = vsel %vm714, %v713, %v712
        %v717 = vsel %vm379, %v698, 0
        %v719 = vsel %vm383, %v715, 0
        %721 = vmatprep.subr.mxu0 0.0
        %722 = vmatpush1.msra.mxu0 %v719
        %723 = vmatprep.subr.mxu0 0.0
        %724 = vmatpush1.msra.mxu0 0.0
        %725 = vmatprep.subr.mxu0 0.0
        %726 = vmatpush1.msra.mxu0 0.0
        %727 = vmatprep.subr.mxu0 0.0
        %728 = vmatpush1.msra.mxu0 0.0
        %729 = vmatprep.subr.mxu0 0.0
        %730 = vmatpush1.msra.mxu0 0.0
        %731 = vmatprep.subr.mxu0 0.0
        %732 = vmatpush1.msra.mxu0 0.0
        %733 = vmatprep.subr.mxu0 0.0
        %734 = vmatpush1.msra.mxu0 0.0
        %735 = vmatprep.subr.mxu0 0.0
        %736 = vmatpush1.msra.mxu0 0.0
        %737 = vmatprep.subr.mxu0 0.0
        %738 = vmatpush1.msra.mxu0 0.0
        %739 = vmatprep.subr.mxu0 0.0
        %740 = vmatpush1.msra.mxu0 0.0
        %741 = vmatprep.subr.mxu0 0.0
        %742 = vmatpush1.msra.mxu0 0.0
        %743 = vmatprep.subr.mxu0 0.0
        %744 = vmatpush1.msra.mxu0 0.0
        %745 = vmatprep.subr.mxu0 0.0
        %746 = vmatpush1.msra.mxu0 0.0
        %747 = vmatprep.subr.mxu0 0.0
        %748 = vmatpush1.msra.mxu0 0.0
        %749 = vmatprep.subr.mxu0 0.0
        %750 = vmatpush1.msra.mxu0 0.0
        %751 = vmatprep.subr.mxu0 0.0
        %752 = vmatpush1.msra.mxu0 0.0
        %753 = vmatprep.subr.mxu0 0.0
        %754 = vmatpush1.msra.mxu0 0.0
        %755 = vmatprep.subr.mxu0 0.0
        %756 = vmatpush1.msra.mxu0 0.0
        %757 = vmatprep.subr.mxu0 0.0
        %758 = vmatpush1.msra.mxu0 0.0
        %759 = vmatprep.subr.mxu0 0.0
        %760 = vmatpush1.msra.mxu0 0.0
        %761 = vmatprep.subr.mxu0 0.0
        %762 = vmatpush1.msra.mxu0 0.0
        %763 = vmatprep.subr.mxu0 0.0
        %764 = vmatpush1.msra.mxu0 0.0
        %765 = vmatprep.subr.mxu0 0.0
        %766 = vmatpush1.msra.mxu0 0.0
        %767 = vmatprep.subr.mxu0 0.0
        %768 = vmatpush1.msra.mxu0 0.0
        %769 = vmatprep.subr.mxu0 0.0
        %770 = vmatpush1.msra.mxu0 0.0
        %771 = vmatprep.subr.mxu0 0.0
        %772 = vmatpush1.msra.mxu0 0.0
        %773 = vmatprep.subr.mxu0 0.0
        %774 = vmatpush1.msra.mxu0 0.0
        %775 = vmatprep.subr.mxu0 0.0
        %776 = vmatpush1.msra.mxu0 0.0
        %777 = vmatprep.subr.mxu0 0.0
        %778 = vmatpush1.msra.mxu0 0.0
        %779 = vmatprep.subr.mxu0 0.0
        %780 = vmatpush1.msra.mxu0 0.0
        %781 = vmatprep.subr.mxu0 0.0
        %782 = vmatpush1.msra.mxu0 0.0
        %783 = vmatprep.subr.mxu0 0.0
        %784 = vmatpush1.msra.mxu0 0.0
        %785 = vmatprep.mubr.f32.mxu0 0.0
        %786 = vmatmul.mubr.f32.gmra.mrb[0].mxu0 %v717
        %v787 = vpop.f32.mrb[0].mxu0
        %v788 = vadd.f32 0.0, %v787
        %v789 = vpop.f32.mrb[0].mxu0
        %790 = vdwg.mxu0
        %791 = vst.msk [vmem:[%s255] sm:$0xff] %vm372, %v788
        %v792 = vld [vmem:[%s3] sm:$0xff]
        %v793 = vld [vmem:[#allocation3 + $0x1] sm:$0x1]
        %v794 = vld [vmem:[#allocation3 + $0x9] sm:$0x1]
        %v795 = vld [vmem:[#allocation3 + $0x11] sm:$0x1]
        %v796 = vld [vmem:[#allocation3 + $0x19] sm:$0x1]
        %v801 = vrot.slane %v794, 7
        %v802 = vsel %vm708, %v801, %v793
        %v803 = vrot.slane %v795, 6
        %v804 = vsel %vm711, %v803, %v802
        %v805 = vrot.slane %v796, 5
        %v806 = vsel %vm714, %v805, %v804
        %v808 = vsel %vm379, %v792, 0
        %v810 = vsel %vm383, %v806, 0
        %812 = vmatprep.subr.mxu0 0.0
        %813 = vmatpush1.msra.mxu0 %v810
        %814 = vmatprep.subr.mxu0 0.0
        %815 = vmatpush1.msra.mxu0 0.0
        %816 = vmatprep.subr.mxu0 0.0
        %817 = vmatpush1.msra.mxu0 0.0
        %818 = vmatprep.subr.mxu0 0.0
        %819 = vmatpush1.msra.mxu0 0.0
        %820 = vmatprep.subr.mxu0 0.0
        %821 = vmatpush1.msra.mxu0 0.0
        %822 = vmatprep.subr.mxu0 0.0
        %823 = vmatpush1.msra.mxu0 0.0
        %824 = vmatprep.subr.mxu0 0.0
        %825 = vmatpush1.msra.mxu0 0.0
        %826 = vmatprep.subr.mxu0 0.0
        %827 = vmatpush1.msra.mxu0 0.0
        %828 = vmatprep.subr.mxu0 0.0
        %829 = vmatpush1.msra.mxu0 0.0
        %830 = vmatprep.subr.mxu0 0.0
        %831 = vmatpush1.msra.mxu0 0.0
        %832 = vmatprep.subr.mxu0 0.0
        %833 = vmatpush1.msra.mxu0 0.0
        %834 = vmatprep.subr.mxu0 0.0
        %835 = vmatpush1.msra.mxu0 0.0
        %836 = vmatprep.subr.mxu0 0.0
        %837 = vmatpush1.msra.mxu0 0.0
        %838 = vmatprep.subr.mxu0 0.0
        %839 = vmatpush1.msra.mxu0 0.0
        %840 = vmatprep.subr.mxu0 0.0
        %841 = vmatpush1.msra.mxu0 0.0
        %842 = vmatprep.subr.mxu0 0.0
        %843 = vmatpush1.msra.mxu0 0.0
        %844 = vmatprep.subr.mxu0 0.0
        %845 = vmatpush1.msra.mxu0 0.0
        %846 = vmatprep.subr.mxu0 0.0
        %847 = vmatpush1.msra.mxu0 0.0
        %848 = vmatprep.subr.mxu0 0.0
        %849 = vmatpush1.msra.mxu0 0.0
        %850 = vmatprep.subr.mxu0 0.0
        %851 = vmatpush1.msra.mxu0 0.0
        %852 = vmatprep.subr.mxu0 0.0
        %853 = vmatpush1.msra.mxu0 0.0
        %854 = vmatprep.subr.mxu0 0.0
        %855 = vmatpush1.msra.mxu0 0.0
        %856 = vmatprep.subr.mxu0 0.0
        %857 = vmatpush1.msra.mxu0 0.0
        %858 = vmatprep.subr.mxu0 0.0
        %859 = vmatpush1.msra.mxu0 0.0
        %860 = vmatprep.subr.mxu0 0.0
        %861 = vmatpush1.msra.mxu0 0.0
        %862 = vmatprep.subr.mxu0 0.0
        %863 = vmatpush1.msra.mxu0 0.0
        %864 = vmatprep.subr.mxu0 0.0
        %865 = vmatpush1.msra.mxu0 0.0
        %866 = vmatprep.subr.mxu0 0.0
        %867 = vmatpush1.msra.mxu0 0.0
        %868 = vmatprep.subr.mxu0 0.0
        %869 = vmatpush1.msra.mxu0 0.0
        %870 = vmatprep.subr.mxu0 0.0
        %871 = vmatpush1.msra.mxu0 0.0
        %872 = vmatprep.subr.mxu0 0.0
        %873 = vmatpush1.msra.mxu0 0.0
        %874 = vmatprep.subr.mxu0 0.0
        %875 = vmatpush1.msra.mxu0 0.0
        %876 = vmatprep.mubr.f32.mxu0 0.0
        %877 = vmatmul.mubr.f32.gmra.mrb[0].mxu0 %v808
        %v878 = vpop.f32.mrb[0].mxu0
        %v879 = vadd.f32 0.0, %v878
        %v880 = vpop.f32.mrb[0].mxu0
        %881 = vdwg.mxu0
        %883 = vrot.lane.b32.xlu0 %v879, 16
        %v884 = vpop.permute.xlu0 %883
        %vm886 = vcmask 261248
        %887 = vst.msk [vmem:[%s255] sm:$0xff] %vm886, %v884
        %v888 = vld [vmem:[%s3] sm:$0xff]
        %v889 = vld [vmem:[#allocation3 + $0x2] sm:$0x1]
        %v890 = vld [vmem:[#allocation3 + $0xa] sm:$0x1]
        %v891 = vld [vmem:[#allocation3 + $0x12] sm:$0x1]
        %v892 = vld [vmem:[#allocation3 + $0x1a] sm:$0x1]
        %v897 = vrot.slane %v890, 7
        %v898 = vsel %vm708, %v897, %v889
        %v899 = vrot.slane %v891, 6
        %v900 = vsel %vm711, %v899, %v898
        %v901 = vrot.slane %v892, 5
        %v902 = vsel %vm714, %v901, %v900
        %v904 = vsel %vm379, %v888, 0
        %v906 = vsel %vm383, %v902, 0
        %908 = vmatprep.subr.mxu0 0.0
        %909 = vmatpush1.msra.mxu0 %v906
        %910 = vmatprep.subr.mxu0 0.0
        %911 = vmatpush1.msra.mxu0 0.0
        %912 = vmatprep.subr.mxu0 0.0
        %913 = vmatpush1.msra.mxu0 0.0
        %914 = vmatprep.subr.mxu0 0.0
        %915 = vmatpush1.msra.mxu0 0.0
        %916 = vmatprep.subr.mxu0 0.0
        %917 = vmatpush1.msra.mxu0 0.0
        %918 = vmatprep.subr.mxu0 0.0
        %919 = vmatpush1.msra.mxu0 0.0
        %920 = vmatprep.subr.mxu0 0.0
        %921 = vmatpush1.msra.mxu0 0.0
        %922 = vmatprep.subr.mxu0 0.0
        %923 = vmatpush1.msra.mxu0 0.0
        %924 = vmatprep.subr.mxu0 0.0
        %925 = vmatpush1.msra.mxu0 0.0
        %926 = vmatprep.subr.mxu0 0.0
        %927 = vmatpush1.msra.mxu0 0.0
        %928 = vmatprep.subr.mxu0 0.0
        %929 = vmatpush1.msra.mxu0 0.0
        %930 = vmatprep.subr.mxu0 0.0
        %931 = vmatpush1.msra.mxu0 0.0
        %932 = vmatprep.subr.mxu0 0.0
        %933 = vmatpush1.msra.mxu0 0.0
        %934 = vmatprep.subr.mxu0 0.0
        %935 = vmatpush1.msra.mxu0 0.0
        %936 = vmatprep.subr.mxu0 0.0
        %937 = vmatpush1.msra.mxu0 0.0
        %938 = vmatprep.subr.mxu0 0.0
        %939 = vmatpush1.msra.mxu0 0.0
        %940 = vmatprep.subr.mxu0 0.0
        %941 = vmatpush1.msra.mxu0 0.0
        %942 = vmatprep.subr.mxu0 0.0
        %943 = vmatpush1.msra.mxu0 0.0
        %944 = vmatprep.subr.mxu0 0.0
        %945 = vmatpush1.msra.mxu0 0.0
        %946 = vmatprep.subr.mxu0 0.0
        %947 = vmatpush1.msra.mxu0 0.0
        %948 = vmatprep.subr.mxu0 0.0
        %949 = vmatpush1.msra.mxu0 0.0
        %950 = vmatprep.subr.mxu0 0.0
        %951 = vmatpush1.msra.mxu0 0.0
        %952 = vmatprep.subr.mxu0 0.0
        %953 = vmatpush1.msra.mxu0 0.0
        %954 = vmatprep.subr.mxu0 0.0
        %955 = vmatpush1.msra.mxu0 0.0
        %956 = vmatprep.subr.mxu0 0.0
        %957 = vmatpush1.msra.mxu0 0.0
        %958 = vmatprep.subr.mxu0 0.0
        %959 = vmatpush1.msra.mxu0 0.0
        %960 = vmatprep.subr.mxu0 0.0
        %961 = vmatpush1.msra.mxu0 0.0
        %962 = vmatprep.subr.mxu0 0.0
        %963 = vmatpush1.msra.mxu0 0.0
        %964 = vmatprep.subr.mxu0 0.0
        %965 = vmatpush1.msra.mxu0 0.0
        %966 = vmatprep.subr.mxu0 0.0
        %967 = vmatpush1.msra.mxu0 0.0
        %968 = vmatprep.subr.mxu0 0.0
        %969 = vmatpush1.msra.mxu0 0.0
        %970 = vmatprep.subr.mxu0 0.0
        %971 = vmatpush1.msra.mxu0 0.0
        %972 = vmatprep.mubr.f32.mxu0 0.0
        %973 = vmatmul.mubr.f32.gmra.mrb[0].mxu0 %v904
        %v974 = vpop.f32.mrb[0].mxu0
        %v975 = vadd.f32 0.0, %v974
        %v976 = vpop.f32.mrb[0].mxu0
        %977 = vdwg.mxu0
        %979 = vrot.lane.b32.xlu0 %v975, 32
        %v980 = vpop.permute.xlu0 %979
        %vm982 = vcmask 392448
        %983 = vst.msk [vmem:[%s255] sm:$0xff] %vm982, %v980
        %v984 = vld [vmem:[%s3] sm:$0xff]
        %v985 = vld [vmem:[#allocation3 + $0x3] sm:$0x1]
        %v986 = vld [vmem:[#allocation3 + $0xb] sm:$0x1]
        %v987 = vld [vmem:[#allocation3 + $0x13] sm:$0x1]
        %v988 = vld [vmem:[#allocation3 + $0x1b] sm:$0x1]
        %v993 = vrot.slane %v986, 7
        %v994 = vsel %vm708, %v993, %v985
        %v995 = vrot.slane %v987, 6
        %v996 = vsel %vm711, %v995, %v994
        %v997 = vrot.slane %v988, 5
        %v998 = vsel %vm714, %v997, %v996
        %v1000 = vsel %vm379, %v984, 0
        %v1002 = vsel %vm383, %v998, 0
        %1004 = vmatprep.subr.mxu0 0.0
        %1005 = vmatpush1.msra.mxu0 %v1002
        %1006 = vmatprep.subr.mxu0 0.0
        %1007 = vmatpush1.msra.mxu0 0.0
        %1008 = vmatprep.subr.mxu0 0.0
        %1009 = vmatpush1.msra.mxu0 0.0
        %1010 = vmatprep.subr.mxu0 0.0
        %1011 = vmatpush1.msra.mxu0 0.0
        %1012 = vmatprep.subr.mxu0 0.0
        %1013 = vmatpush1.msra.mxu0 0.0
        %1014 = vmatprep.subr.mxu0 0.0
        %1015 = vmatpush1.msra.mxu0 0.0
        %1016 = vmatprep.subr.mxu0 0.0
        %1017 = vmatpush1.msra.mxu0 0.0
        %1018 = vmatprep.subr.mxu0 0.0
        %1019 = vmatpush1.msra.mxu0 0.0
        %1020 = vmatprep.subr.mxu0 0.0
        %1021 = vmatpush1.msra.mxu0 0.0
        %1022 = vmatprep.subr.mxu0 0.0
        %1023 = vmatpush1.msra.mxu0 0.0
        %1024 = vmatprep.subr.mxu0 0.0
        %1025 = vmatpush1.msra.mxu0 0.0
        %1026 = vmatprep.subr.mxu0 0.0
        %1027 = vmatpush1.msra.mxu0 0.0
        %1028 = vmatprep.subr.mxu0 0.0
        %1029 = vmatpush1.msra.mxu0 0.0
        %1030 = vmatprep.subr.mxu0 0.0
        %1031 = vmatpush1.msra.mxu0 0.0
        %1032 = vmatprep.subr.mxu0 0.0
        %1033 = vmatpush1.msra.mxu0 0.0
        %1034 = vmatprep.subr.mxu0 0.0
        %1035 = vmatpush1.msra.mxu0 0.0
        %1036 = vmatprep.subr.mxu0 0.0
        %1037 = vmatpush1.msra.mxu0 0.0
        %1038 = vmatprep.subr.mxu0 0.0
        %1039 = vmatpush1.msra.mxu0 0.0
        %1040 = vmatprep.subr.mxu0 0.0
        %1041 = vmatpush1.msra.mxu0 0.0
        %1042 = vmatprep.subr.mxu0 0.0
        %1043 = vmatpush1.msra.mxu0 0.0
        %1044 = vmatprep.subr.mxu0 0.0
        %1045 = vmatpush1.msra.mxu0 0.0
        %1046 = vmatprep.subr.mxu0 0.0
        %1047 = vmatpush1.msra.mxu0 0.0
        %1048 = vmatprep.subr.mxu0 0.0
        %1049 = vmatpush1.msra.mxu0 0.0
        %1050 = vmatprep.subr.mxu0 0.0
        %1051 = vmatpush1.msra.mxu0 0.0
        %1052 = vmatprep.subr.mxu0 0.0
        %1053 = vmatpush1.msra.mxu0 0.0
        %1054 = vmatprep.subr.mxu0 0.0
        %1055 = vmatpush1.msra.mxu0 0.0
        %1056 = vmatprep.subr.mxu0 0.0
        %1057 = vmatpush1.msra.mxu0 0.0
        %1058 = vmatprep.subr.mxu0 0.0
        %1059 = vmatpush1.msra.mxu0 0.0
        %1060 = vmatprep.subr.mxu0 0.0
        %1061 = vmatpush1.msra.mxu0 0.0
        %1062 = vmatprep.subr.mxu0 0.0
        %1063 = vmatpush1.msra.mxu0 0.0
        %1064 = vmatprep.subr.mxu0 0.0
        %1065 = vmatpush1.msra.mxu0 0.0
        %1066 = vmatprep.subr.mxu0 0.0
        %1067 = vmatpush1.msra.mxu0 0.0
        %1068 = vmatprep.mubr.f32.mxu0 0.0
        %1069 = vmatmul.mubr.f32.gmra.mrb[0].mxu0 %v1000
        %v1070 = vpop.f32.mrb[0].mxu0
        %v1071 = vadd.f32 0.0, %v1070
        %v1072 = vpop.f32.mrb[0].mxu0
        %1073 = vdwg.mxu0
        %1075 = vrot.lane.b32.xlu0 %v1071, 48
        %v1076 = vpop.permute.xlu0 %1075
        %vm1078 = vcmask 523648
        %1079 = vst.msk [vmem:[%s255] sm:$0xff] %vm1078, %v1076
        %v1080 = vld [vmem:[%s3] sm:$0xff]
        %v1081 = vld [vmem:[#allocation3 + $0x4] sm:$0x1]
        %v1082 = vld [vmem:[#allocation3 + $0xc] sm:$0x1]
        %v1083 = vld [vmem:[#allocation3 + $0x14] sm:$0x1]
        %v1084 = vld [vmem:[#allocation3 + $0x1c] sm:$0x1]
        %v1089 = vrot.slane %v1082, 7
        %v1090 = vsel %vm708, %v1089, %v1081
        %v1091 = vrot.slane %v1083, 6
        %v1092 = vsel %vm711, %v1091, %v1090
        %v1093 = vrot.slane %v1084, 5
        %v1094 = vsel %vm714, %v1093, %v1092
        %v1096 = vsel %vm379, %v1080, 0
        %v1098 = vsel %vm383, %v1094, 0
        %1100 = vmatprep.subr.mxu0 0.0
        %1101 = vmatpush1.msra.mxu0 %v1098
        %1102 = vmatprep.subr.mxu0 0.0
        %1103 = vmatpush1.msra.mxu0 0.0
        %1104 = vmatprep.subr.mxu0 0.0
        %1105 = vmatpush1.msra.mxu0 0.0
        %1106 = vmatprep.subr.mxu0 0.0
        %1107 = vmatpush1.msra.mxu0 0.0
        %1108 = vmatprep.subr.mxu0 0.0
        %1109 = vmatpush1.msra.mxu0 0.0
        %1110 = vmatprep.subr.mxu0 0.0
        %1111 = vmatpush1.msra.mxu0 0.0
        %1112 = vmatprep.subr.mxu0 0.0
        %1113 = vmatpush1.msra.mxu0 0.0
        %1114 = vmatprep.subr.mxu0 0.0
        %1115 = vmatpush1.msra.mxu0 0.0
        %1116 = vmatprep.subr.mxu0 0.0
        %1117 = vmatpush1.msra.mxu0 0.0
        %1118 = vmatprep.subr.mxu0 0.0
        %1119 = vmatpush1.msra.mxu0 0.0
        %1120 = vmatprep.subr.mxu0 0.0
        %1121 = vmatpush1.msra.mxu0 0.0
        %1122 = vmatprep.subr.mxu0 0.0
        %1123 = vmatpush1.msra.mxu0 0.0
        %1124 = vmatprep.subr.mxu0 0.0
        %1125 = vmatpush1.msra.mxu0 0.0
        %1126 = vmatprep.subr.mxu0 0.0
        %1127 = vmatpush1.msra.mxu0 0.0
        %1128 = vmatprep.subr.mxu0 0.0
        %1129 = vmatpush1.msra.mxu0 0.0
        %1130 = vmatprep.subr.mxu0 0.0
        %1131 = vmatpush1.msra.mxu0 0.0
        %1132 = vmatprep.subr.mxu0 0.0
        %1133 = vmatpush1.msra.mxu0 0.0
        %1134 = vmatprep.subr.mxu0 0.0
        %1135 = vmatpush1.msra.mxu0 0.0
        %1136 = vmatprep.subr.mxu0 0.0
        %1137 = vmatpush1.msra.mxu0 0.0
        %1138 = vmatprep.subr.mxu0 0.0
        %1139 = vmatpush1.msra.mxu0 0.0
        %1140 = vmatprep.subr.mxu0 0.0
        %1141 = vmatpush1.msra.mxu0 0.0
        %1142 = vmatprep.subr.mxu0 0.0
        %1143 = vmatpush1.msra.mxu0 0.0
        %1144 = vmatprep.subr.mxu0 0.0
        %1145 = vmatpush1.msra.mxu0 0.0
        %1146 = vmatprep.subr.mxu0 0.0
        %1147 = vmatpush1.msra.mxu0 0.0
        %1148 = vmatprep.subr.mxu0 0.0
        %1149 = vmatpush1.msra.mxu0 0.0
        %1150 = vmatprep.subr.mxu0 0.0
        %1151 = vmatpush1.msra.mxu0 0.0
        %1152 = vmatprep.subr.mxu0 0.0
        %1153 = vmatpush1.msra.mxu0 0.0
        %1154 = vmatprep.subr.mxu0 0.0
        %1155 = vmatpush1.msra.mxu0 0.0
        %1156 = vmatprep.subr.mxu0 0.0
        %1157 = vmatpush1.msra.mxu0 0.0
        %1158 = vmatprep.subr.mxu0 0.0
        %1159 = vmatpush1.msra.mxu0 0.0
        %1160 = vmatprep.subr.mxu0 0.0
        %1161 = vmatpush1.msra.mxu0 0.0
        %1162 = vmatprep.subr.mxu0 0.0
        %1163 = vmatpush1.msra.mxu0 0.0
        %1164 = vmatprep.mubr.f32.mxu0 0.0
        %1165 = vmatmul.mubr.f32.gmra.mrb[0].mxu0 %v1096
        %v1166 = vpop.f32.mrb[0].mxu0
        %v1167 = vadd.f32 0.0, %v1166
        %v1168 = vpop.f32.mrb[0].mxu0
        %1169 = vdwg.mxu0
        %1171 = vrot.lane.b32.xlu0 %v1167, 64
        %v1172 = vpop.permute.xlu0 %1171
        %vm1174 = vcmask 654848
        %1175 = vst.msk [vmem:[%s255] sm:$0xff] %vm1174, %v1172
        %v1176 = vld [vmem:[%s3] sm:$0xff]
        %v1177 = vld [vmem:[#allocation3 + $0x5] sm:$0x1]
        %v1178 = vld [vmem:[#allocation3 + $0xd] sm:$0x1]
        %v1179 = vld [vmem:[#allocation3 + $0x15] sm:$0x1]
        %v1180 = vld [vmem:[#allocation3 + $0x1d] sm:$0x1]
        %v1185 = vrot.slane %v1178, 7
        %v1186 = vsel %vm708, %v1185, %v1177
        %v1187 = vrot.slane %v1179, 6
        %v1188 = vsel %vm711, %v1187, %v1186
        %v1189 = vrot.slane %v1180, 5
        %v1190 = vsel %vm714, %v1189, %v1188
        %v1192 = vsel %vm379, %v1176, 0
        %v1194 = vsel %vm383, %v1190, 0
        %1196 = vmatprep.subr.mxu0 0.0
        %1197 = vmatpush1.msra.mxu0 %v1194
        %1198 = vmatprep.subr.mxu0 0.0
        %1199 = vmatpush1.msra.mxu0 0.0
        %1200 = vmatprep.subr.mxu0 0.0
        %1201 = vmatpush1.msra.mxu0 0.0
        %1202 = vmatprep.subr.mxu0 0.0
        %1203 = vmatpush1.msra.mxu0 0.0
        %1204 = vmatprep.subr.mxu0 0.0
        %1205 = vmatpush1.msra.mxu0 0.0
        %1206 = vmatprep.subr.mxu0 0.0
        %1207 = vmatpush1.msra.mxu0 0.0
        %1208 = vmatprep.subr.mxu0 0.0
        %1209 = vmatpush1.msra.mxu0 0.0
        %1210 = vmatprep.subr.mxu0 0.0
        %1211 = vmatpush1.msra.mxu0 0.0
        %1212 = vmatprep.subr.mxu0 0.0
        %1213 = vmatpush1.msra.mxu0 0.0
        %1214 = vmatprep.subr.mxu0 0.0
        %1215 = vmatpush1.msra.mxu0 0.0
        %1216 = vmatprep.subr.mxu0 0.0
        %1217 = vmatpush1.msra.mxu0 0.0
        %1218 = vmatprep.subr.mxu0 0.0
        %1219 = vmatpush1.msra.mxu0 0.0
        %1220 = vmatprep.subr.mxu0 0.0
        %1221 = vmatpush1.msra.mxu0 0.0
        %1222 = vmatprep.subr.mxu0 0.0
        %1223 = vmatpush1.msra.mxu0 0.0
        %1224 = vmatprep.subr.mxu0 0.0
        %1225 = vmatpush1.msra.mxu0 0.0
        %1226 = vmatprep.subr.mxu0 0.0
        %1227 = vmatpush1.msra.mxu0 0.0
        %1228 = vmatprep.subr.mxu0 0.0
        %1229 = vmatpush1.msra.mxu0 0.0
        %1230 = vmatprep.subr.mxu0 0.0
        %1231 = vmatpush1.msra.mxu0 0.0
        %1232 = vmatprep.subr.mxu0 0.0
        %1233 = vmatpush1.msra.mxu0 0.0
        %1234 = vmatprep.subr.mxu0 0.0
        %1235 = vmatpush1.msra.mxu0 0.0
        %1236 = vmatprep.subr.mxu0 0.0
        %1237 = vmatpush1.msra.mxu0 0.0
        %1238 = vmatprep.subr.mxu0 0.0
        %1239 = vmatpush1.msra.mxu0 0.0
        %1240 = vmatprep.subr.mxu0 0.0
        %1241 = vmatpush1.msra.mxu0 0.0
        %1242 = vmatprep.subr.mxu0 0.0
        %1243 = vmatpush1.msra.mxu0 0.0
        %1244 = vmatprep.subr.mxu0 0.0
        %1245 = vmatpush1.msra.mxu0 0.0
        %1246 = vmatprep.subr.mxu0 0.0
        %1247 = vmatpush1.msra.mxu0 0.0
        %1248 = vmatprep.subr.mxu0 0.0
        %1249 = vmatpush1.msra.mxu0 0.0
        %1250 = vmatprep.subr.mxu0 0.0
        %1251 = vmatpush1.msra.mxu0 0.0
        %1252 = vmatprep.subr.mxu0 0.0
        %1253 = vmatpush1.msra.mxu0 0.0
        %1254 = vmatprep.subr.mxu0 0.0
        %1255 = vmatpush1.msra.mxu0 0.0
        %1256 = vmatprep.subr.mxu0 0.0
        %1257 = vmatpush1.msra.mxu0 0.0
        %1258 = vmatprep.subr.mxu0 0.0
        %1259 = vmatpush1.msra.mxu0 0.0
        %1260 = vmatprep.mubr.f32.mxu0 0.0
        %1261 = vmatmul.mubr.f32.gmra.mrb[0].mxu0 %v1192
        %v1262 = vpop.f32.mrb[0].mxu0
        %v1263 = vadd.f32 0.0, %v1262
        %v1264 = vpop.f32.mrb[0].mxu0
        %1265 = vdwg.mxu0
        %1267 = vrot.lane.b32.xlu0 %v1263, 80
        %v1268 = vpop.permute.xlu0 %1267
        %vm1270 = vcmask 786048
        %1271 = vst.msk [vmem:[%s255] sm:$0xff] %vm1270, %v1268
        %v1272 = vld [vmem:[%s3] sm:$0xff]
        %v1273 = vld [vmem:[#allocation3 + $0x6] sm:$0x1]
        %v1274 = vld [vmem:[#allocation3 + $0xe] sm:$0x1]
        %v1275 = vld [vmem:[#allocation3 + $0x16] sm:$0x1]
        %v1276 = vld [vmem:[#allocation3 + $0x1e] sm:$0x1]
        %v1281 = vrot.slane %v1274, 7
        %v1282 = vsel %vm708, %v1281, %v1273
        %v1283 = vrot.slane %v1275, 6
        %v1284 = vsel %vm711, %v1283, %v1282
        %v1285 = vrot.slane %v1276, 5
        %v1286 = vsel %vm714, %v1285, %v1284
        %v1288 = vsel %vm379, %v1272, 0
        %v1290 = vsel %vm383, %v1286, 0
        %1292 = vmatprep.subr.mxu0 0.0
        %1293 = vmatpush1.msra.mxu0 %v1290
        %1294 = vmatprep.subr.mxu0 0.0
        %1295 = vmatpush1.msra.mxu0 0.0
        %1296 = vmatprep.subr.mxu0 0.0
        %1297 = vmatpush1.msra.mxu0 0.0
        %1298 = vmatprep.subr.mxu0 0.0
        %1299 = vmatpush1.msra.mxu0 0.0
        %1300 = vmatprep.subr.mxu0 0.0
        %1301 = vmatpush1.msra.mxu0 0.0
        %1302 = vmatprep.subr.mxu0 0.0
        %1303 = vmatpush1.msra.mxu0 0.0
        %1304 = vmatprep.subr.mxu0 0.0
        %1305 = vmatpush1.msra.mxu0 0.0
        %1306 = vmatprep.subr.mxu0 0.0
        %1307 = vmatpush1.msra.mxu0 0.0
        %1308 = vmatprep.subr.mxu0 0.0
        %1309 = vmatpush1.msra.mxu0 0.0
        %1310 = vmatprep.subr.mxu0 0.0
        %1311 = vmatpush1.msra.mxu0 0.0
        %1312 = vmatprep.subr.mxu0 0.0
        %1313 = vmatpush1.msra.mxu0 0.0
        %1314 = vmatprep.subr.mxu0 0.0
        %1315 = vmatpush1.msra.mxu0 0.0
        %1316 = vmatprep.subr.mxu0 0.0
        %1317 = vmatpush1.msra.mxu0 0.0
        %1318 = vmatprep.subr.mxu0 0.0
        %1319 = vmatpush1.msra.mxu0 0.0
        %1320 = vmatprep.subr.mxu0 0.0
        %1321 = vmatpush1.msra.mxu0 0.0
        %1322 = vmatprep.subr.mxu0 0.0
        %1323 = vmatpush1.msra.mxu0 0.0
        %1324 = vmatprep.subr.mxu0 0.0
        %1325 = vmatpush1.msra.mxu0 0.0
        %1326 = vmatprep.subr.mxu0 0.0
        %1327 = vmatpush1.msra.mxu0 0.0
        %1328 = vmatprep.subr.mxu0 0.0
        %1329 = vmatpush1.msra.mxu0 0.0
        %1330 = vmatprep.subr.mxu0 0.0
        %1331 = vmatpush1.msra.mxu0 0.0
        %1332 = vmatprep.subr.mxu0 0.0
        %1333 = vmatpush1.msra.mxu0 0.0
        %1334 = vmatprep.subr.mxu0 0.0
        %1335 = vmatpush1.msra.mxu0 0.0
        %1336 = vmatprep.subr.mxu0 0.0
        %1337 = vmatpush1.msra.mxu0 0.0
        %1338 = vmatprep.subr.mxu0 0.0
        %1339 = vmatpush1.msra.mxu0 0.0
        %1340 = vmatprep.subr.mxu0 0.0
        %1341 = vmatpush1.msra.mxu0 0.0
        %1342 = vmatprep.subr.mxu0 0.0
        %1343 = vmatpush1.msra.mxu0 0.0
        %1344 = vmatprep.subr.mxu0 0.0
        %1345 = vmatpush1.msra.mxu0 0.0
        %1346 = vmatprep.subr.mxu0 0.0
        %1347 = vmatpush1.msra.mxu0 0.0
        %1348 = vmatprep.subr.mxu0 0.0
        %1349 = vmatpush1.msra.mxu0 0.0
        %1350 = vmatprep.subr.mxu0 0.0
        %1351 = vmatpush1.msra.mxu0 0.0
        %1352 = vmatprep.subr.mxu0 0.0
        %1353 = vmatpush1.msra.mxu0 0.0
        %1354 = vmatprep.subr.mxu0 0.0
        %1355 = vmatpush1.msra.mxu0 0.0
        %1356 = vmatprep.mubr.f32.mxu0 0.0
        %1357 = vmatmul.mubr.f32.gmra.mrb[0].mxu0 %v1288
        %v1358 = vpop.f32.mrb[0].mxu0
        %v1359 = vadd.f32 0.0, %v1358
        %v1360 = vpop.f32.mrb[0].mxu0
        %1361 = vdwg.mxu0
        %1363 = vrot.lane.b32.xlu0 %v1359, 96
        %v1364 = vpop.permute.xlu0 %1363
        %vm1366 = vcmask 917248
        %1367 = vst.msk [vmem:[%s255] sm:$0xff] %vm1366, %v1364
        %v1368 = vld [vmem:[%s3] sm:$0xff]
        %v1369 = vld [vmem:[#allocation3 + $0x7] sm:$0x1]
        %v1370 = vld [vmem:[#allocation3 + $0xf] sm:$0x1]
        %v1371 = vld [vmem:[#allocation3 + $0x17] sm:$0x1]
        %v1372 = vld [vmem:[#allocation3 + $0x1f] sm:$0x1]
        %v1377 = vrot.slane %v1370, 7
        %v1378 = vsel %vm708, %v1377, %v1369
        %v1379 = vrot.slane %v1371, 6
        %v1380 = vsel %vm711, %v1379, %v1378
        %v1381 = vrot.slane %v1372, 5
        %v1382 = vsel %vm714, %v1381, %v1380
        %v1384 = vsel %vm379, %v1368, 0
        %v1386 = vsel %vm383, %v1382, 0
        %1388 = vmatprep.subr.mxu0 0.0
        %1389 = vmatpush1.msra.mxu0 %v1386
        %1390 = vmatprep.subr.mxu0 0.0
        %1391 = vmatpush1.msra.mxu0 0.0
        %1392 = vmatprep.subr.mxu0 0.0
        %1393 = vmatpush1.msra.mxu0 0.0
        %1394 = vmatprep.subr.mxu0 0.0
        %1395 = vmatpush1.msra.mxu0 0.0
        %1396 = vmatprep.subr.mxu0 0.0
        %1397 = vmatpush1.msra.mxu0 0.0
        %1398 = vmatprep.subr.mxu0 0.0
        %1399 = vmatpush1.msra.mxu0 0.0
        %1400 = vmatprep.subr.mxu0 0.0
        %1401 = vmatpush1.msra.mxu0 0.0
        %1402 = vmatprep.subr.mxu0 0.0
        %1403 = vmatpush1.msra.mxu0 0.0
        %1404 = vmatprep.subr.mxu0 0.0
        %1405 = vmatpush1.msra.mxu0 0.0
        %1406 = vmatprep.subr.mxu0 0.0
        %1407 = vmatpush1.msra.mxu0 0.0
        %1408 = vmatprep.subr.mxu0 0.0
        %1409 = vmatpush1.msra.mxu0 0.0
        %1410 = vmatprep.subr.mxu0 0.0
        %1411 = vmatpush1.msra.mxu0 0.0
        %1412 = vmatprep.subr.mxu0 0.0
        %1413 = vmatpush1.msra.mxu0 0.0
        %1414 = vmatprep.subr.mxu0 0.0
        %1415 = vmatpush1.msra.mxu0 0.0
        %1416 = vmatprep.subr.mxu0 0.0
        %1417 = vmatpush1.msra.mxu0 0.0
        %1418 = vmatprep.subr.mxu0 0.0
        %1419 = vmatpush1.msra.mxu0 0.0
        %1420 = vmatprep.subr.mxu0 0.0
        %1421 = vmatpush1.msra.mxu0 0.0
        %1422 = vmatprep.subr.mxu0 0.0
        %1423 = vmatpush1.msra.mxu0 0.0
        %1424 = vmatprep.subr.mxu0 0.0
        %1425 = vmatpush1.msra.mxu0 0.0
        %1426 = vmatprep.subr.mxu0 0.0
        %1427 = vmatpush1.msra.mxu0 0.0
        %1428 = vmatprep.subr.mxu0 0.0
        %1429 = vmatpush1.msra.mxu0 0.0
        %1430 = vmatprep.subr.mxu0 0.0
        %1431 = vmatpush1.msra.mxu0 0.0
        %1432 = vmatprep.subr.mxu0 0.0
        %1433 = vmatpush1.msra.mxu0 0.0
        %1434 = vmatprep.subr.mxu0 0.0
        %1435 = vmatpush1.msra.mxu0 0.0
        %1436 = vmatprep.subr.mxu0 0.0
        %1437 = vmatpush1.msra.mxu0 0.0
        %1438 = vmatprep.subr.mxu0 0.0
        %1439 = vmatpush1.msra.mxu0 0.0
        %1440 = vmatprep.subr.mxu0 0.0
        %1441 = vmatpush1.msra.mxu0 0.0
        %1442 = vmatprep.subr.mxu0 0.0
        %1443 = vmatpush1.msra.mxu0 0.0
        %1444 = vmatprep.subr.mxu0 0.0
        %1445 = vmatpush1.msra.mxu0 0.0
        %1446 = vmatprep.subr.mxu0 0.0
        %1447 = vmatpush1.msra.mxu0 0.0
        %1448 = vmatprep.subr.mxu0 0.0
        %1449 = vmatpush1.msra.mxu0 0.0
        %1450 = vmatprep.subr.mxu0 0.0
        %1451 = vmatpush1.msra.mxu0 0.0
        %1452 = vmatprep.mubr.f32.mxu0 0.0
        %1453 = vmatmul.mubr.f32.gmra.mrb[0].mxu0 %v1384
        %v1454 = vpop.f32.mrb[0].mxu0
        %v1455 = vadd.f32 0.0, %v1454
        %v1456 = vpop.f32.mrb[0].mxu0
        %1457 = vdwg.mxu0
        %1459 = vrot.lane.b32.xlu0 %v1455, 112
        %v1460 = vpop.permute.xlu0 %1459
        %vm1462 = vcmask 1048448
        %1463 = vst.msk [vmem:[%s255] sm:$0xff] %vm1462, %v1460
        %s1464 = sand.u32 %s161, 1
        %s1465 = scalar_lea.sflag [#allocation5], %s1464
        %s1466 = sand.u32 %s161, 1
        %s1467 = smul.addr %s1466, 8
        %s1468 = scalar_lea.vmem [#allocation4], %s1467
        // Predicated region
        $region41: #{tpu_custom_call.1} parent=39 // pred_check
          %p1469 = pneg %p171
        $region42: #{tpu_custom_call.1} parent=39 // pred_check_branch
          %1471 = sbr.rel (%p1469) target = $region44
        $region43: #{tpu_custom_call.1} parent=39 // pred_region
          %s1473 = ssub.s32 128, 128
          %1474 = vsyncadd %s1465, %s1473
          %s1475 = sadd.s32 %s24, %s23
          %s1476 = smul.addr %s1475, 128
          %s1477 = scalar_lea.hbm %s5, %s1476
          %s1479 = sshll.u32 %s1468, 4
          %s1480 = int_to_ptr.vmem [resolvable:$true] %s1479
          %1482 = dma.vmem_to_hbm [thread:$0]  %s1480, 128, %s1477, %s1465
        $region44: #{tpu_custom_call.1} parent=39 // pred_fallthru
          _
      $region40: #{tpu_custom_call.1} parent=5 // pred_fallthru
        _
      %p1483 = scmp.le.s32.totalorder 2, %s14
      // Predicated region
      $region45: #{tpu_custom_call.1} parent=5 // pred_check
        %p1484 = pneg %p1483
      $region46: #{tpu_custom_call.1} parent=5 // pred_check_branch
        %1486 = sbr.rel (%p1484) target = $region48
      $region47: #{tpu_custom_call.1} parent=5 // pred_region
        %s1487 = ssub.s32 %s14, 2
        // Predicated region
        $region49: #{tpu_custom_call.1} parent=47 // pred_check
          %p1488 = pneg %p177
        $region50: #{tpu_custom_call.1} parent=47 // pred_check_branch
          %1490 = sbr.rel (%p1488) target = $region52
        $region51: #{tpu_custom_call.1} parent=47 // pred_region
          %s1491 = sand.u32 %s162, 1
          %s1492 = scalar_lea.sflag [#allocation5], %s1491
          %s1493 = sand.u32 %s162, 1
          %s1494 = smul.addr %s1493, 8
          %s1495 = scalar_lea.vmem [#allocation4], %s1494
          %1496 = dma.done %s1492, 128
        $region52: #{tpu_custom_call.1} parent=47 // pred_fallthru
          _
      $region48: #{tpu_custom_call.1} parent=5 // pred_fallthru
        _
    $region6: #{tpu_custom_call.1} parent=1 // loop_footer
      %s18 = sadd.s32 1, %s14
    $region7: #{tpu_custom_call.1} parent=1 // loop_footer_branch
      %13 = sbr.rel target = $region3
    $region8: #{tpu_custom_call.1} parent=1 // loop_exit
      _
    %1497 = vsyncpa [#allocation5], 1
    %s1498 = scalar_lea.sflag [#allocation5], 1
    %1499 = vsyncpa %s1498, 1

</llo_original>
